<compile_context>
chip_gen: v7x
topology: tpu7x:2x2x1
jax: 0.10.0
libtpu: 0.0.40
codegen_flags: <defaults>
</compile_context>

<pallas_src>
import functools
import math

import jax
import jax.numpy as jnp
import numpy as np
from jax.experimental import pallas as pl
from jax.experimental.pallas import tpu as pltpu

# Logical (PyTorch) dims
IN_DIM = 40      # input mel features
H_DIM = 100      # d_model
FF_DIM = 200     # dim_feedforward = h_dim * 2
CLS_H = 256      # classifier hidden
NUM_CLS = 600
EPS = 1e-5       # nn.LayerNorm default eps

# Lane-padded dims (multiples of 128 -> full vregs, unmasked stores, aligned MXU tiles)
H_PAD = 128
FF_PAD = 256
CLS_H_PAD = 256
NUM_PAD = 640

# Explicit VMEM budget: above the v5e (16 MiB) / v6e+v7x (32 MiB) scoped
# defaults, with headroom under v7x's 64 MiB physical VMEM.
VMEM_LIMIT_BYTES = 40 * 1024 * 1024
# Target flattened rows per encoder grid step (M = BB*T). ~2048 rows keeps the
# live f32 intermediates (~15-20 MiB) inside the budget above while keeping the
# MXU M dimension full on all generations.
TARGET_ROWS = 2048


# ----------------------------------------------------------------------------
# Encoder kernel: fc_pre + PE + single-head self-attention + FF + 2x LayerNorm
# + mean pool, for a block of BB samples per grid step. Emits pooled (BB, H_PAD).
# ----------------------------------------------------------------------------
def encoder_kernel(
    mels_ref, pe_ref,
    w_pre_ref, b_pre_ref,
    w_qkv_ref, b_qkv_ref,
    wo_ref, bo_ref,
    g1_ref, beta1_ref,
    w_ff1_ref, b_ff1_ref, w_ff2_ref, b_ff2_ref,
    g2_ref, beta2_ref,
    pooled_ref,
    *, compute_dtype,
):
    BB, T, _ = mels_ref.shape
    cd = compute_dtype

    # Lane mask over the real (unpadded) d_model features, for LayerNorm stats.
    lane = jax.lax.broadcasted_iota(jnp.int32, (1, H_PAD), 1)
    hmask = (lane < H_DIM).astype(jnp.float32)

    def layer_norm(x, g, b):
        # Padded lanes of x are exactly zero by construction, so sum/100 is the
        # true mean over the real 100 features; the mask makes the variance exact.
        mu = jnp.sum(x, axis=-1, keepdims=True) * (1.0 / H_DIM)
        d = (x - mu) * hmask
        var = jnp.sum(d * d, axis=-1, keepdims=True) * (1.0 / H_DIM)
        # g/b padded with zeros -> padded lanes of the output stay zero.
        return d * jax.lax.rsqrt(var + EPS) * g + b

    def dot(a, w):
        return jnp.dot(a.astype(cd), w, preferred_element_type=jnp.float32)

    # ---- token-wise work on the flattened (BB*T, .) slab ----
    # fc_pre: Linear(IN -> d_model); mels travels at true IN_DIM (K=40)
    x = dot(mels_ref[...].reshape(BB * T, IN_DIM), w_pre_ref[...]) + b_pre_ref[...]

    # add sinusoidal positional encoding via a (T, H_PAD) broadcast (no pre-tiling)
    src = (x.reshape(BB, T, H_PAD) + pe_ref[...]).reshape(BB * T, H_PAD)

    # fused Q|K|V projection: one (BB*T,128)x(128,384) matmul
    qkv = dot(src, w_qkv_ref[...]) + b_qkv_ref[...]
    q = qkv[:, 0 * H_PAD:1 * H_PAD].reshape(BB, T, H_PAD)
    k = qkv[:, 1 * H_PAD:2 * H_PAD].reshape(BB, T, H_PAD)
    v = qkv[:, 2 * H_PAD:3 * H_PAD].reshape(BB, T, H_PAD)

    # per-sample (T,T) single-head attention, batched over BB (no explicit k.T)
    scores = jnp.einsum(
        "bqd,bkd->bqk", q.astype(cd), k.astype(cd),
        preferred_element_type=jnp.float32) * (1.0 / math.sqrt(H_DIM))
    scores = scores - jnp.max(scores, axis=-1, keepdims=True)
    p = jnp.exp(scores)
    attn = p * pl.reciprocal(jnp.sum(p, axis=-1, keepdims=True), approx=True)
    ao = jnp.einsum(
        "bqk,bkd->bqd", attn.astype(cd), v.astype(cd),
        preferred_element_type=jnp.float32)
    ao = dot(ao.reshape(BB * T, H_PAD), wo_ref[...]) + bo_ref[...]

    # residual + LayerNorm 1
    src = layer_norm(src + ao, g1_ref[...], beta1_ref[...])

    # feed-forward: Linear -> ReLU -> (Dropout=identity) -> Linear
    h = jnp.maximum(dot(src, w_ff1_ref[...]) + b_ff1_ref[...], 0.0)
    ff = dot(h, w_ff2_ref[...]) + b_ff2_ref[...]

    # residual + LayerNorm 2
    src = layer_norm(src + ff, g2_ref[...], beta2_ref[...])

    # mean pool over the sequence -> (BB, H_PAD)
    pooled_ref[...] = jnp.sum(src.reshape(BB, T, H_PAD), axis=1) * (1.0 / T)


# ----------------------------------------------------------------------------
# Classifier kernel: Linear(100->256) -> ReLU -> Linear(256->600), run over the
# whole (padded) batch at once so M fills the MXU.
# ----------------------------------------------------------------------------
def classifier_kernel(pooled_ref, w_c1_ref, b_c1_ref, w_c2_ref, b_c2_ref,
                      out_ref, *, compute_dtype):
    cd = compute_dtype
    x = pooled_ref[...]
    c = jnp.maximum(
        jnp.dot(x.astype(cd), w_c1_ref[...], preferred_element_type=jnp.float32)
        + b_c1_ref[...], 0.0)
    out_ref[...] = (
        jnp.dot(c.astype(cd), w_c2_ref[...], preferred_element_type=jnp.float32)
        + b_c2_ref[...])  # (CB, NUM_PAD) lane-dense store


# ----------------------------------------------------------------------------
# Plain-JAX glue: parameter setup, padding/packing, positional-encoding buffer,
# pallas_call wrappers.
# ----------------------------------------------------------------------------
def positional_encoding(length, d_model):
    pos = jnp.arange(length, dtype=jnp.float32)[:, None]
    div = jnp.exp(jnp.arange(0, d_model, 2, dtype=jnp.float32)
                  * (-math.log(10000.0) / d_model))
    pe = jnp.zeros((length, d_model), dtype=jnp.float32)
    pe = pe.at[:, 0::2].set(jnp.sin(pos * div))
    pe = pe.at[:, 1::2].set(jnp.cos(pos * div))
    return pe


def init_params(key, scale=0.1):
    ks = jax.random.split(key, 11)

    def lin(k, fan_in, fan_out):
        kw, kb = jax.random.split(k)
        # weights stored as (in, out): y = x @ W + b
        w = jax.random.normal(kw, (fan_in, fan_out), jnp.float32) * scale
        b = jax.random.normal(kb, (1, fan_out), jnp.float32) * scale
        return w, b

    p = {}
    p["w_pre"], p["b_pre"] = lin(ks[0], IN_DIM, H_DIM)
    p["wq"], p["bq"] = lin(ks[1], H_DIM, H_DIM)
    p["wk"], p["bk"] = lin(ks[2], H_DIM, H_DIM)
    p["wv"], p["bv"] = lin(ks[3], H_DIM, H_DIM)
    p["wo"], p["bo"] = lin(ks[4], H_DIM, H_DIM)
    p["g1"] = jnp.ones((1, H_DIM), jnp.float32)
    p["beta1"] = jnp.zeros((1, H_DIM), jnp.float32)
    p["w_ff1"], p["b_ff1"] = lin(ks[5], H_DIM, FF_DIM)
    p["w_ff2"], p["b_ff2"] = lin(ks[6], FF_DIM, H_DIM)
    p["g2"] = jnp.ones((1, H_DIM), jnp.float32)
    p["beta2"] = jnp.zeros((1, H_DIM), jnp.float32)
    p["w_c1"], p["b_c1"] = lin(ks[7], H_DIM, CLS_H)
    p["w_c2"], p["b_c2"] = lin(ks[8], CLS_H, NUM_CLS)
    return p


def _pad_to(x, shape):
    pads = [(0, s - d) for d, s in zip(x.shape, shape)]
    return jnp.pad(x, pads)


def pack_params(params, matmul_dtype):
    """Zero-pad weights/biases to lane-aligned shapes; fuse Q|K|V; split
    encoder vs classifier weight lists."""
    wd = matmul_dtype
    w_qkv = jnp.concatenate([
        _pad_to(params["wq"], (H_PAD, H_PAD)),
        _pad_to(params["wk"], (H_PAD, H_PAD)),
        _pad_to(params["wv"], (H_PAD, H_PAD))], axis=1).astype(wd)
    b_qkv = jnp.concatenate([
        _pad_to(params["bq"], (1, H_PAD)),
        _pad_to(params["bk"], (1, H_PAD)),
        _pad_to(params["bv"], (1, H_PAD))], axis=1)
    enc = [
        _pad_to(params["w_pre"], (IN_DIM, H_PAD)).astype(wd),   # K stays 40
        _pad_to(params["b_pre"], (1, H_PAD)),
        w_qkv, b_qkv,
        _pad_to(params["wo"], (H_PAD, H_PAD)).astype(wd),
        _pad_to(params["bo"], (1, H_PAD)),
        _pad_to(params["g1"], (1, H_PAD)),
        _pad_to(params["beta1"], (1, H_PAD)),
        _pad_to(params["w_ff1"], (H_PAD, FF_PAD)).astype(wd),
        _pad_to(params["b_ff1"], (1, FF_PAD)),
        _pad_to(params["w_ff2"], (FF_PAD, H_PAD)).astype(wd),
        _pad_to(params["b_ff2"], (1, H_PAD)),
        _pad_to(params["g2"], (1, H_PAD)),
        _pad_to(params["beta2"], (1, H_PAD)),
    ]
    cls = [
        _pad_to(params["w_c1"], (H_PAD, CLS_H_PAD)).astype(wd),
        _pad_to(params["b_c1"], (1, CLS_H_PAD)),
        _pad_to(params["w_c2"], (CLS_H_PAD, NUM_PAD)).astype(wd),
        _pad_to(params["b_c2"], (1, NUM_PAD)),
    ]
    return enc, cls


def transformer_forward(mels, params, *, block_b=None, matmul_dtype=jnp.bfloat16):
    """Full forward. matmul_dtype=jnp.bfloat16 (default) uses bf16 MXU operands
    with f32 accumulation; pass jnp.float32 for bit-tight validation."""
    B, T, F = mels.shape
    assert F == IN_DIM

    # Per-step batch block: aim for BB*T ~ TARGET_ROWS flattened rows.
    if block_b is None:
        block_b = max(8, (TARGET_ROWS // max(T, 1)) // 8 * 8)
    if B <= block_b:
        BB = B
        B_pad = B
    else:
        assert block_b % 8 == 0
        BB = block_b
        B_pad = ((B + BB - 1) // BB) * BB
    grid_b = B_pad // BB

    # mels: batch-pad only; features stay at the true IN_DIM and travel in the
    # matmul dtype (dominant per-step HBM stream kept minimal).
    mels_p = _pad_to(mels.astype(matmul_dtype), (B_pad, T, IN_DIM))

    # sinusoidal PE, passed once as (T, H_PAD) and broadcast inside the kernel
    pe = _pad_to(positional_encoding(T, H_DIM), (T, H_PAD))

    enc_w, cls_w = pack_params(params, matmul_dtype)

    def full_spec(shape):
        nd = len(shape)
        return pl.BlockSpec(shape, lambda b, _nd=nd: (0,) * _nd)

    cp = pltpu.CompilerParams(dimension_semantics=("parallel",),
                              vmem_limit_bytes=VMEM_LIMIT_BYTES)

    # ---- encoder: grid over batch blocks, emits pooled (B_pad, H_PAD) ----
    enc_kernel = functools.partial(encoder_kernel, compute_dtype=matmul_dtype)
    pooled = pl.pallas_call(
        enc_kernel,
        out_shape=jax.ShapeDtypeStruct((B_pad, H_PAD), jnp.float32),
        grid=(grid_b,),
        in_specs=[pl.BlockSpec((BB, T, IN_DIM), lambda b: (b, 0, 0)),
                  pl.BlockSpec((T, H_PAD), lambda b: (0, 0))]
                 + [full_spec(w.shape) for w in enc_w],
        out_specs=pl.BlockSpec((BB, H_PAD), lambda b: (b, 0)),
        compiler_params=cp,
    )(mels_p, pe, *enc_w)

    # ---- classifier: whole batch per step (M = CB >> BB) ----
    if B_pad > 512:
        CB = 512
        B_cls = ((B_pad + CB - 1) // CB) * CB
        pooled = jnp.pad(pooled, ((0, B_cls - B_pad), (0, 0)))
    else:
        CB = B_pad
        B_cls = B_pad
    grid_c = B_cls // CB

    cls_kernel = functools.partial(classifier_kernel, compute_dtype=matmul_dtype)
    logits = pl.pallas_call(
        cls_kernel,
        out_shape=jax.ShapeDtypeStruct((B_cls, NUM_PAD), jnp.float32),
        grid=(grid_c,),
        in_specs=[pl.BlockSpec((CB, H_PAD), lambda b: (b, 0))]
                 + [full_spec(w.shape) for w in cls_w],
        out_specs=pl.BlockSpec((CB, NUM_PAD), lambda b: (b, 0)),
        compiler_params=cp,
    )(pooled, *cls_w)

    # slice away batch padding and the padded class lanes
    return logits[:B, :NUM_CLS]


# ----------------------------------------------------------------------------
# Pure-JAX reference (mirrors the PyTorch forward in eval mode).
# ----------------------------------------------------------------------------
def reference_forward(mels, params):
    B, T, _ = mels.shape
    pe = positional_encoding(T, H_DIM)

    def layer_norm(x, g, b):
        mu = jnp.mean(x, axis=-1, keepdims=True)
        var = jnp.mean((x - mu) ** 2, axis=-1, keepdims=True)
        return (x - mu) / jnp.sqrt(var + EPS) * g + b

    x = mels @ params["w_pre"] + params["b_pre"]
    src = x + pe[None]
    q = src @ params["wq"] + params["bq"]
    k = src @ params["wk"] + params["bk"]
    v = src @ params["wv"] + params["bv"]
    scores = jnp.einsum("btd,bsd->bts", q, k) / math.sqrt(H_DIM)
    attn = jax.nn.softmax(scores, axis=-1)
    ao = jnp.einsum("bts,bsd->btd", attn, v) @ params["wo"] + params["bo"]
    src = layer_norm(src + ao, params["g1"], params["beta1"])
    h = jnp.maximum(src @ params["w_ff1"] + params["b_ff1"], 0.0)
    ff = h @ params["w_ff2"] + params["b_ff2"]
    src = layer_norm(src + ff, params["g2"], params["beta2"])
    pooled = jnp.mean(src, axis=1)
    c = jnp.maximum(pooled @ params["w_c1"] + params["b_c1"], 0.0)
    return c @ params["w_c2"] + params["b_c2"]


if __name__ == "__main__":
    key = jax.random.PRNGKey(0)
    k_x, k_p = jax.random.split(key)

    B, T = 2, 8
    mels = jax.random.normal(k_x, (B, T, IN_DIM), jnp.float32)
    params = init_params(k_p)

    ref = jax.block_until_ready(reference_forward(mels, params))

    # f32 MXU operands: bit-tight validation of the kernel structure.
    out_f32 = jax.block_until_ready(
        transformer_forward(mels, params, matmul_dtype=jnp.float32))
    assert out_f32.shape == (B, NUM_CLS), out_f32.shape
    np.testing.assert_allclose(np.asarray(out_f32), np.asarray(ref),
                               atol=2e-2, rtol=2e-2)

    # default bf16 MXU operands (f32 accumulation): perf config, looser tolerance.
    out_bf16 = jax.block_until_ready(transformer_forward(mels, params))
    assert out_bf16.shape == (B, NUM_CLS), out_bf16.shape
    np.testing.assert_allclose(np.asarray(out_bf16), np.asarray(ref),
                               atol=8e-2, rtol=8e-2)

    print("KERNEL_OK")
</pallas_src>

<mosaic_0001>
module attributes {stable_mosaic.version = 11 : i64} {
  func.func @encoder_kernel(%arg0: i32, %arg1: memref<2x8x40xf32, #tpu.memory_space<vmem>>, %arg2: memref<8x128xf32, #tpu.memory_space<vmem>>, %arg3: memref<40x128xf32, #tpu.memory_space<vmem>>, %arg4: memref<1x128xf32, #tpu.memory_space<vmem>>, %arg5: memref<128x384xf32, #tpu.memory_space<vmem>>, %arg6: memref<1x384xf32, #tpu.memory_space<vmem>>, %arg7: memref<128x128xf32, #tpu.memory_space<vmem>>, %arg8: memref<1x128xf32, #tpu.memory_space<vmem>>, %arg9: memref<1x128xf32, #tpu.memory_space<vmem>>, %arg10: memref<1x128xf32, #tpu.memory_space<vmem>>, %arg11: memref<128x256xf32, #tpu.memory_space<vmem>>, %arg12: memref<1x256xf32, #tpu.memory_space<vmem>>, %arg13: memref<256x128xf32, #tpu.memory_space<vmem>>, %arg14: memref<1x128xf32, #tpu.memory_space<vmem>>, %arg15: memref<1x128xf32, #tpu.memory_space<vmem>>, %arg16: memref<1x128xf32, #tpu.memory_space<vmem>>, %arg17: memref<2x128xf32, #tpu.memory_space<vmem>>) attributes {dimension_semantics = [#tpu.dimension_semantics<parallel>], iteration_bounds = array<i64: 1>, scalar_prefetch = 0 : i64, scratch_operands = 0 : i64, tpu.core_type = #tpu.core_type<tc>, window_params = [{transform_indices = @transform_0, window_bounds = array<i64: 2, 8, 40>}, {pipeline_mode = #tpu.pipeline_mode<synchronous>, transform_indices = @transform_1, window_bounds = array<i64: 8, 128>}, {pipeline_mode = #tpu.pipeline_mode<synchronous>, transform_indices = @transform_2, window_bounds = array<i64: 40, 128>}, {pipeline_mode = #tpu.pipeline_mode<synchronous>, transform_indices = @transform_3, window_bounds = array<i64: 1, 128>}, {pipeline_mode = #tpu.pipeline_mode<synchronous>, transform_indices = @transform_4, window_bounds = array<i64: 128, 384>}, {pipeline_mode = #tpu.pipeline_mode<synchronous>, transform_indices = @transform_5, window_bounds = array<i64: 1, 384>}, {pipeline_mode = #tpu.pipeline_mode<synchronous>, transform_indices = @transform_6, window_bounds = array<i64: 128, 128>}, {pipeline_mode = #tpu.pipeline_mode<synchronous>, transform_indices = @transform_7, window_bounds = array<i64: 1, 128>}, {pipeline_mode = #tpu.pipeline_mode<synchronous>, transform_indices = @transform_8, window_bounds = array<i64: 1, 128>}, {pipeline_mode = #tpu.pipeline_mode<synchronous>, transform_indices = @transform_9, window_bounds = array<i64: 1, 128>}, {pipeline_mode = #tpu.pipeline_mode<synchronous>, transform_indices = @transform_10, window_bounds = array<i64: 128, 256>}, {pipeline_mode = #tpu.pipeline_mode<synchronous>, transform_indices = @transform_11, window_bounds = array<i64: 1, 256>}, {pipeline_mode = #tpu.pipeline_mode<synchronous>, transform_indices = @transform_12, window_bounds = array<i64: 256, 128>}, {pipeline_mode = #tpu.pipeline_mode<synchronous>, transform_indices = @transform_13, window_bounds = array<i64: 1, 128>}, {pipeline_mode = #tpu.pipeline_mode<synchronous>, transform_indices = @transform_14, window_bounds = array<i64: 1, 128>}, {pipeline_mode = #tpu.pipeline_mode<synchronous>, transform_indices = @transform_15, window_bounds = array<i64: 1, 128>}, {transform_indices = @transform_16, window_bounds = array<i64: 2, 128>}]} {
    %0 = tpu.iota {dimensions = array<i32: 1>} : vector<1x128xi32>
    %c100_i32 = arith.constant 100 : i32
    %1 = vector.broadcast %c100_i32 : i32 to vector<1x128xi32>
    %2 = arith.cmpi slt, %0, %1 : vector<1x128xi32>
    %3 = arith.extui %2 : vector<1x128xi1> to vector<1x128xi32>
    %4 = arith.sitofp %3 : vector<1x128xi32> to vector<1x128xf32>
    %c0 = arith.constant 0 : index
    %c0_0 = arith.constant 0 : index
    %c0_1 = arith.constant 0 : index
    %5 = vector.load %arg1[%c0, %c0_0, %c0_1] : memref<2x8x40xf32, #tpu.memory_space<vmem>>, vector<2x8x40xf32>
    %6 = vector.shape_cast %5 : vector<2x8x40xf32> to vector<16x40xf32>
    %c0_2 = arith.constant 0 : index
    %c0_3 = arith.constant 0 : index
    %7 = vector.load %arg3[%c0_2, %c0_3] : memref<40x128xf32, #tpu.memory_space<vmem>>, vector<40x128xf32>
    %cst = arith.constant dense<0.000000e+00> : vector<16x128xf32>
    %8 = tpu.matmul %6, %7, %cst {dimension_numbers = #tpu.dot_dimension_numbers<[1], [0], [0], [1], [0, 0, 1, 1], [], []>} : vector<16x40xf32>, vector<40x128xf32>, vector<16x128xf32> -> vector<16x128xf32>
    %c0_4 = arith.constant 0 : index
    %c0_5 = arith.constant 0 : index
    %9 = vector.load %arg4[%c0_4, %c0_5] : memref<1x128xf32, #tpu.memory_space<vmem>>, vector<1x128xf32>
    %10 = vector.broadcast %9 : vector<1x128xf32> to vector<16x128xf32>
    %11 = arith.addf %8, %10 : vector<16x128xf32>
    %12 = vector.shape_cast %11 : vector<16x128xf32> to vector<2x8x128xf32>
    %c0_6 = arith.constant 0 : index
    %c0_7 = arith.constant 0 : index
    %13 = vector.load %arg2[%c0_6, %c0_7] : memref<8x128xf32, #tpu.memory_space<vmem>>, vector<8x128xf32>
    %14 = vector.shape_cast %13 : vector<8x128xf32> to vector<1x8x128xf32>
    %15 = vector.broadcast %14 : vector<1x8x128xf32> to vector<2x8x128xf32>
    %16 = arith.addf %12, %15 : vector<2x8x128xf32>
    %17 = vector.shape_cast %16 : vector<2x8x128xf32> to vector<16x128xf32>
    %c0_8 = arith.constant 0 : index
    %c0_9 = arith.constant 0 : index
    %18 = vector.load %arg5[%c0_8, %c0_9] : memref<128x384xf32, #tpu.memory_space<vmem>>, vector<128x384xf32>
    %cst_10 = arith.constant dense<0.000000e+00> : vector<16x384xf32>
    %19 = tpu.matmul %17, %18, %cst_10 {dimension_numbers = #tpu.dot_dimension_numbers<[1], [0], [0], [1], [0, 0, 1, 1], [], []>} : vector<16x128xf32>, vector<128x384xf32>, vector<16x384xf32> -> vector<16x384xf32>
    %c0_11 = arith.constant 0 : index
    %c0_12 = arith.constant 0 : index
    %20 = vector.load %arg6[%c0_11, %c0_12] : memref<1x384xf32, #tpu.memory_space<vmem>>, vector<1x384xf32>
    %21 = vector.broadcast %20 : vector<1x384xf32> to vector<16x384xf32>
    %22 = arith.addf %19, %21 : vector<16x384xf32>
    %23 = vector.extract_strided_slice %22 {offsets = [0, 0], sizes = [16, 128], strides = [1, 1]} : vector<16x384xf32> to vector<16x128xf32>
    %24 = vector.shape_cast %23 : vector<16x128xf32> to vector<2x8x128xf32>
    %25 = vector.extract_strided_slice %22 {offsets = [0, 128], sizes = [16, 128], strides = [1, 1]} : vector<16x384xf32> to vector<16x128xf32>
    %26 = vector.shape_cast %25 : vector<16x128xf32> to vector<2x8x128xf32>
    %27 = vector.extract_strided_slice %22 {offsets = [0, 256], sizes = [16, 128], strides = [1, 1]} : vector<16x384xf32> to vector<16x128xf32>
    %28 = vector.shape_cast %27 : vector<16x128xf32> to vector<2x8x128xf32>
    "tpu.trace_start"() <{level = 10 : i32, message = "bqd,bkd->bqk"}> : () -> ()
    %cst_13 = arith.constant dense<0.000000e+00> : vector<2x8x8xf32>
    %29 = tpu.matmul %24, %26, %cst_13 {dimension_numbers = #tpu.dot_dimension_numbers<[2], [2], [1], [1], [0, 0, 0, 1, 1, 1], [0], [0]>} : vector<2x8x128xf32>, vector<2x8x128xf32>, vector<2x8x8xf32> -> vector<2x8x8xf32>
    "tpu.trace_stop"() : () -> ()
    %cst_14 = arith.constant 1.000000e-01 : f32
    %30 = vector.broadcast %cst_14 : f32 to vector<2x8x8xf32>
    %31 = arith.mulf %29, %30 : vector<2x8x8xf32>
    %cst_15 = arith.constant dense<0xFF800000> : vector<2x8xf32>
    %32 = vector.multi_reduction <maximumf>, %31, %cst_15 [2] : vector<2x8x8xf32> to vector<2x8xf32>
    %33 = vector.shape_cast %32 : vector<2x8xf32> to vector<2x8x1xf32>
    %34 = vector.broadcast %33 : vector<2x8x1xf32> to vector<2x8x8xf32>
    %35 = arith.subf %31, %34 : vector<2x8x8xf32>
    %36 = math.exp %35 : vector<2x8x8xf32>
    %cst_16 = arith.constant dense<0.000000e+00> : vector<2x8xf32>
    %37 = vector.multi_reduction <add>, %36, %cst_16 [2] : vector<2x8x8xf32> to vector<2x8xf32>
    %38 = vector.shape_cast %37 : vector<2x8xf32> to vector<2x8x1xf32>
    %39 = tpu.reciprocal %38 {approx = true} : vector<2x8x1xf32> -> vector<2x8x1xf32>
    %40 = vector.broadcast %39 : vector<2x8x1xf32> to vector<2x8x8xf32>
    %41 = arith.mulf %36, %40 : vector<2x8x8xf32>
    "tpu.trace_start"() <{level = 10 : i32, message = "bqk,bkd->bqd"}> : () -> ()
    %cst_17 = arith.constant dense<0.000000e+00> : vector<2x8x128xf32>
    %42 = tpu.matmul %41, %28, %cst_17 {dimension_numbers = #tpu.dot_dimension_numbers<[2], [1], [1], [2], [0, 0, 0, 1, 1, 2], [0], [0]>} : vector<2x8x8xf32>, vector<2x8x128xf32>, vector<2x8x128xf32> -> vector<2x8x128xf32>
    "tpu.trace_stop"() : () -> ()
    %43 = vector.shape_cast %42 : vector<2x8x128xf32> to vector<16x128xf32>
    %c0_18 = arith.constant 0 : index
    %c0_19 = arith.constant 0 : index
    %44 = vector.load %arg7[%c0_18, %c0_19] : memref<128x128xf32, #tpu.memory_space<vmem>>, vector<128x128xf32>
    %cst_20 = arith.constant dense<0.000000e+00> : vector<16x128xf32>
    %45 = tpu.matmul %43, %44, %cst_20 {dimension_numbers = #tpu.dot_dimension_numbers<[1], [0], [0], [1], [0, 0, 1, 1], [], []>} : vector<16x128xf32>, vector<128x128xf32>, vector<16x128xf32> -> vector<16x128xf32>
    %c0_21 = arith.constant 0 : index
    %c0_22 = arith.constant 0 : index
    %46 = vector.load %arg8[%c0_21, %c0_22] : memref<1x128xf32, #tpu.memory_space<vmem>>, vector<1x128xf32>
    %47 = vector.broadcast %46 : vector<1x128xf32> to vector<16x128xf32>
    %48 = arith.addf %45, %47 : vector<16x128xf32>
    %49 = arith.addf %17, %48 : vector<16x128xf32>
    %c0_23 = arith.constant 0 : index
    %c0_24 = arith.constant 0 : index
    %50 = vector.load %arg9[%c0_23, %c0_24] : memref<1x128xf32, #tpu.memory_space<vmem>>, vector<1x128xf32>
    %c0_25 = arith.constant 0 : index
    %c0_26 = arith.constant 0 : index
    %51 = vector.load %arg10[%c0_25, %c0_26] : memref<1x128xf32, #tpu.memory_space<vmem>>, vector<1x128xf32>
    %cst_27 = arith.constant dense<0.000000e+00> : vector<16xf32>
    %52 = vector.multi_reduction <add>, %49, %cst_27 [1] : vector<16x128xf32> to vector<16xf32>
    %53 = vector.shape_cast %52 : vector<16xf32> to vector<16x1xf32>
    %cst_28 = arith.constant 0.00999999977 : f32
    %54 = vector.broadcast %cst_28 : f32 to vector<16x1xf32>
    %55 = arith.mulf %53, %54 : vector<16x1xf32>
    %56 = vector.broadcast %55 : vector<16x1xf32> to vector<16x128xf32>
    %57 = arith.subf %49, %56 : vector<16x128xf32>
    %58 = vector.broadcast %4 : vector<1x128xf32> to vector<16x128xf32>
    %59 = arith.mulf %57, %58 : vector<16x128xf32>
    %60 = arith.mulf %59, %59 : vector<16x128xf32>
    %cst_29 = arith.constant dense<0.000000e+00> : vector<16xf32>
    %61 = vector.multi_reduction <add>, %60, %cst_29 [1] : vector<16x128xf32> to vector<16xf32>
    %62 = vector.shape_cast %61 : vector<16xf32> to vector<16x1xf32>
    %cst_30 = arith.constant 0.00999999977 : f32
    %63 = vector.broadcast %cst_30 : f32 to vector<16x1xf32>
    %64 = arith.mulf %62, %63 : vector<16x1xf32>
    %cst_31 = arith.constant 9.99999974E-6 : f32
    %65 = vector.broadcast %cst_31 : f32 to vector<16x1xf32>
    %66 = arith.addf %64, %65 : vector<16x1xf32>
    %67 = math.rsqrt %66 : vector<16x1xf32>
    %68 = vector.broadcast %67 : vector<16x1xf32> to vector<16x128xf32>
    %69 = arith.mulf %59, %68 : vector<16x128xf32>
    %70 = vector.broadcast %50 : vector<1x128xf32> to vector<16x128xf32>
    %71 = arith.mulf %69, %70 : vector<16x128xf32>
    %72 = vector.broadcast %51 : vector<1x128xf32> to vector<16x128xf32>
    %73 = arith.addf %71, %72 : vector<16x128xf32>
    %c0_32 = arith.constant 0 : index
    %c0_33 = arith.constant 0 : index
    %74 = vector.load %arg11[%c0_32, %c0_33] : memref<128x256xf32, #tpu.memory_space<vmem>>, vector<128x256xf32>
    %cst_34 = arith.constant dense<0.000000e+00> : vector<16x256xf32>
    %75 = tpu.matmul %73, %74, %cst_34 {dimension_numbers = #tpu.dot_dimension_numbers<[1], [0], [0], [1], [0, 0, 1, 1], [], []>} : vector<16x128xf32>, vector<128x256xf32>, vector<16x256xf32> -> vector<16x256xf32>
    %c0_35 = arith.constant 0 : index
    %c0_36 = arith.constant 0 : index
    %76 = vector.load %arg12[%c0_35, %c0_36] : memref<1x256xf32, #tpu.memory_space<vmem>>, vector<1x256xf32>
    %77 = vector.broadcast %76 : vector<1x256xf32> to vector<16x256xf32>
    %78 = arith.addf %75, %77 : vector<16x256xf32>
    %cst_37 = arith.constant 0.000000e+00 : f32
    %79 = vector.broadcast %cst_37 : f32 to vector<16x256xf32>
    %80 = arith.maximumf %78, %79 : vector<16x256xf32>
    %c0_38 = arith.constant 0 : index
    %c0_39 = arith.constant 0 : index
    %81 = vector.load %arg13[%c0_38, %c0_39] : memref<256x128xf32, #tpu.memory_space<vmem>>, vector<256x128xf32>
    %cst_40 = arith.constant dense<0.000000e+00> : vector<16x128xf32>
    %82 = tpu.matmul %80, %81, %cst_40 {dimension_numbers = #tpu.dot_dimension_numbers<[1], [0], [0], [1], [0, 0, 1, 1], [], []>} : vector<16x256xf32>, vector<256x128xf32>, vector<16x128xf32> -> vector<16x128xf32>
    %c0_41 = arith.constant 0 : index
    %c0_42 = arith.constant 0 : index
    %83 = vector.load %arg14[%c0_41, %c0_42] : memref<1x128xf32, #tpu.memory_space<vmem>>, vector<1x128xf32>
    %84 = vector.broadcast %83 : vector<1x128xf32> to vector<16x128xf32>
    %85 = arith.addf %82, %84 : vector<16x128xf32>
    %86 = arith.addf %73, %85 : vector<16x128xf32>
    %c0_43 = arith.constant 0 : index
    %c0_44 = arith.constant 0 : index
    %87 = vector.load %arg15[%c0_43, %c0_44] : memref<1x128xf32, #tpu.memory_space<vmem>>, vector<1x128xf32>
    %c0_45 = arith.constant 0 : index
    %c0_46 = arith.constant 0 : index
    %88 = vector.load %arg16[%c0_45, %c0_46] : memref<1x128xf32, #tpu.memory_space<vmem>>, vector<1x128xf32>
    %cst_47 = arith.constant dense<0.000000e+00> : vector<16xf32>
    %89 = vector.multi_reduction <add>, %86, %cst_47 [1] : vector<16x128xf32> to vector<16xf32>
    %90 = vector.shape_cast %89 : vector<16xf32> to vector<16x1xf32>
    %cst_48 = arith.constant 0.00999999977 : f32
    %91 = vector.broadcast %cst_48 : f32 to vector<16x1xf32>
    %92 = arith.mulf %90, %91 : vector<16x1xf32>
    %93 = vector.broadcast %92 : vector<16x1xf32> to vector<16x128xf32>
    %94 = arith.subf %86, %93 : vector<16x128xf32>
    %95 = vector.broadcast %4 : vector<1x128xf32> to vector<16x128xf32>
    %96 = arith.mulf %94, %95 : vector<16x128xf32>
    %97 = arith.mulf %96, %96 : vector<16x128xf32>
    %cst_49 = arith.constant dense<0.000000e+00> : vector<16xf32>
    %98 = vector.multi_reduction <add>, %97, %cst_49 [1] : vector<16x128xf32> to vector<16xf32>
    %99 = vector.shape_cast %98 : vector<16xf32> to vector<16x1xf32>
    %cst_50 = arith.constant 0.00999999977 : f32
    %100 = vector.broadcast %cst_50 : f32 to vector<16x1xf32>
    %101 = arith.mulf %99, %100 : vector<16x1xf32>
    %cst_51 = arith.constant 9.99999974E-6 : f32
    %102 = vector.broadcast %cst_51 : f32 to vector<16x1xf32>
    %103 = arith.addf %101, %102 : vector<16x1xf32>
    %104 = math.rsqrt %103 : vector<16x1xf32>
    %105 = vector.broadcast %104 : vector<16x1xf32> to vector<16x128xf32>
    %106 = arith.mulf %96, %105 : vector<16x128xf32>
    %107 = vector.broadcast %87 : vector<1x128xf32> to vector<16x128xf32>
    %108 = arith.mulf %106, %107 : vector<16x128xf32>
    %109 = vector.broadcast %88 : vector<1x128xf32> to vector<16x128xf32>
    %110 = arith.addf %108, %109 : vector<16x128xf32>
    %111 = vector.shape_cast %110 : vector<16x128xf32> to vector<2x8x128xf32>
    %cst_52 = arith.constant dense<0.000000e+00> : vector<2x128xf32>
    %112 = vector.multi_reduction <add>, %111, %cst_52 [1] : vector<2x8x128xf32> to vector<2x128xf32>
    %cst_53 = arith.constant 1.250000e-01 : f32
    %113 = vector.broadcast %cst_53 : f32 to vector<2x128xf32>
    %114 = arith.mulf %112, %113 : vector<2x128xf32>
    %c0_54 = arith.constant 0 : index
    %c0_55 = arith.constant 0 : index
    %115 = vector.load %arg17[%c0_54, %c0_55] : memref<2x128xf32, #tpu.memory_space<vmem>>, vector<2x128xf32>
    tpu.vector_store %arg17[%c0_54, %c0_55], %114 {strides = array<i32>} : memref<2x128xf32, #tpu.memory_space<vmem>>, vector<2x128xf32>,
    return
  }
  func.func @transform_0(%arg0: i32) -> (i32, i32, i32) {
    %c0_i32 = arith.constant 0 : i32
    %c0_i32_0 = arith.constant 0 : i32
    %c0_i32_1 = arith.constant 0 : i32
    return %arg0, %c0_i32, %c0_i32_0 : i32, i32, i32
  }
  func.func @transform_1(%arg0: i32) -> (i32, i32) {
    %c0_i32 = arith.constant 0 : i32
    %c0_i32_0 = arith.constant 0 : i32
    %c0_i32_1 = arith.constant 0 : i32
    return %c0_i32, %c0_i32_0 : i32, i32
  }
  func.func @transform_2(%arg0: i32) -> (i32, i32) {
    %c0_i32 = arith.constant 0 : i32
    %c0_i32_0 = arith.constant 0 : i32
    %c0_i32_1 = arith.constant 0 : i32
    return %c0_i32, %c0_i32_0 : i32, i32
  }
  func.func @transform_3(%arg0: i32) -> (i32, i32) {
    %c0_i32 = arith.constant 0 : i32
    %c0_i32_0 = arith.constant 0 : i32
    %c0_i32_1 = arith.constant 0 : i32
    return %c0_i32, %c0_i32_0 : i32, i32
  }
  func.func @transform_4(%arg0: i32) -> (i32, i32) {
    %c0_i32 = arith.constant 0 : i32
    %c0_i32_0 = arith.constant 0 : i32
    %c0_i32_1 = arith.constant 0 : i32
    return %c0_i32, %c0_i32_0 : i32, i32
  }
  func.func @transform_5(%arg0: i32) -> (i32, i32) {
    %c0_i32 = arith.constant 0 : i32
    %c0_i32_0 = arith.constant 0 : i32
    %c0_i32_1 = arith.constant 0 : i32
    return %c0_i32, %c0_i32_0 : i32, i32
  }
  func.func @transform_6(%arg0: i32) -> (i32, i32) {
    %c0_i32 = arith.constant 0 : i32
    %c0_i32_0 = arith.constant 0 : i32
    %c0_i32_1 = arith.constant 0 : i32
    return %c0_i32, %c0_i32_0 : i32, i32
  }
  func.func @transform_7(%arg0: i32) -> (i32, i32) {
    %c0_i32 = arith.constant 0 : i32
    %c0_i32_0 = arith.constant 0 : i32
    %c0_i32_1 = arith.constant 0 : i32
    return %c0_i32, %c0_i32_0 : i32, i32
  }
  func.func @transform_8(%arg0: i32) -> (i32, i32) {
    %c0_i32 = arith.constant 0 : i32
    %c0_i32_0 = arith.constant 0 : i32
    %c0_i32_1 = arith.constant 0 : i32
    return %c0_i32, %c0_i32_0 : i32, i32
  }
  func.func @transform_9(%arg0: i32) -> (i32, i32) {
    %c0_i32 = arith.constant 0 : i32
    %c0_i32_0 = arith.constant 0 : i32
    %c0_i32_1 = arith.constant 0 : i32
    return %c0_i32, %c0_i32_0 : i32, i32
  }
  func.func @transform_10(%arg0: i32) -> (i32, i32) {
    %c0_i32 = arith.constant 0 : i32
    %c0_i32_0 = arith.constant 0 : i32
    %c0_i32_1 = arith.constant 0 : i32
    return %c0_i32, %c0_i32_0 : i32, i32
  }
  func.func @transform_11(%arg0: i32) -> (i32, i32) {
    %c0_i32 = arith.constant 0 : i32
    %c0_i32_0 = arith.constant 0 : i32
    %c0_i32_1 = arith.constant 0 : i32
    return %c0_i32, %c0_i32_0 : i32, i32
  }
  func.func @transform_12(%arg0: i32) -> (i32, i32) {
    %c0_i32 = arith.constant 0 : i32
    %c0_i32_0 = arith.constant 0 : i32
    %c0_i32_1 = arith.constant 0 : i32
    return %c0_i32, %c0_i32_0 : i32, i32
  }
  func.func @transform_13(%arg0: i32) -> (i32, i32) {
    %c0_i32 = arith.constant 0 : i32
    %c0_i32_0 = arith.constant 0 : i32
    %c0_i32_1 = arith.constant 0 : i32
    return %c0_i32, %c0_i32_0 : i32, i32
  }
  func.func @transform_14(%arg0: i32) -> (i32, i32) {
    %c0_i32 = arith.constant 0 : i32
    %c0_i32_0 = arith.constant 0 : i32
    %c0_i32_1 = arith.constant 0 : i32
    return %c0_i32, %c0_i32_0 : i32, i32
  }
  func.func @transform_15(%arg0: i32) -> (i32, i32) {
    %c0_i32 = arith.constant 0 : i32
    %c0_i32_0 = arith.constant 0 : i32
    %c0_i32_1 = arith.constant 0 : i32
    return %c0_i32, %c0_i32_0 : i32, i32
  }
  func.func @transform_16(%arg0: i32) -> (i32, i32) {
    %c0_i32 = arith.constant 0 : i32
    %c0_i32_0 = arith.constant 0 : i32
    return %arg0, %c0_i32 : i32, i32
  }
}

</mosaic_0001>

<llo_original>
// kernel: tpu_custom_call.1
$region0: #{tpu_custom_call.1}
  #allocation0 [shape = 'u32[]', space=smem, size = 0x4, offset = 0x4, fixed_abs, tag = 'smem constant byte address 0x4 - core index']
  #allocation1 [shape = 'u32[144,128]{1,0:T(1,128)}', space=vmem, size = 0x12000, scoped, tag = 'internal scratch']
  %s0 = inlined_call_operand.hbm [shape: f32[2,8,40], index: 0, kind: input, shape index: {}]
  %s1 = inlined_call_operand.hbm [shape: f32[8,128], index: 1, kind: input, shape index: {}]
  %s2 = inlined_call_operand.hbm [shape: f32[40,128], index: 2, kind: input, shape index: {}]
  %s3 = inlined_call_operand.vmem [shape: f32[1,128], index: 3, kind: input, shape index: {}]
  %s4 = inlined_call_operand.hbm [shape: f32[128,384], index: 4, kind: input, shape index: {}]
  %s5 = inlined_call_operand.vmem [shape: f32[1,384], index: 5, kind: input, shape index: {}]
  %s6 = inlined_call_operand.hbm [shape: f32[128,128], index: 6, kind: input, shape index: {}]
  %s7 = inlined_call_operand.vmem [shape: f32[1,128], index: 7, kind: input, shape index: {}]
  %s8 = inlined_call_operand.vmem [shape: f32[1,128], index: 8, kind: input, shape index: {}]
  %s9 = inlined_call_operand.vmem [shape: f32[1,128], index: 9, kind: input, shape index: {}]
  %s10 = inlined_call_operand.hbm [shape: f32[128,256], index: 10, kind: input, shape index: {}]
  %s11 = inlined_call_operand.vmem [shape: f32[1,256], index: 11, kind: input, shape index: {}]
  %s12 = inlined_call_operand.hbm [shape: f32[256,128], index: 12, kind: input, shape index: {}]
  %s13 = inlined_call_operand.vmem [shape: f32[1,128], index: 13, kind: input, shape index: {}]
  %s14 = inlined_call_operand.vmem [shape: f32[1,128], index: 14, kind: input, shape index: {}]
  %s15 = inlined_call_operand.vmem [shape: f32[1,128], index: 15, kind: input, shape index: {}]
  %s16 = inlined_call_operand.hbm [shape: f32[2,128], index: 16, kind: output, shape index: {}]
  %s17 = sld [smem:[#allocation0]]
  $region102: #{tpu_custom_call.1} parent=0
    _
  %s19 = ssub.s32 1, %s17
  %s20 = scalar_select 0, %s19, %s17
  $region1: #{tpu_custom_call.1} parent=0
    #allocation2 [shape = 'u8[8192]{0}', space=vmem, size = 0x2000, scoped, tag = 'input window, operand 0, single buffered']
    #allocation3 [shape = 's32[1]{0}', space=sflag, size = 0x4, scoped, tag = 'scoped memory for tpu_custom_call.1']
    #allocation4 [shape = 's32[1]{0}', space=sflag, size = 0x4, scoped, tag = 'scoped memory for tpu_custom_call.1']
    #allocation5 [shape = 'u8[4096]{0}', space=vmem, size = 0x1000, scoped, tag = 'input window, operand 1, single buffered']
    #allocation6 [shape = 's32[1]{0}', space=sflag, size = 0x4, scoped, tag = 'scoped memory for tpu_custom_call.1']
    #allocation7 [shape = 'u8[20480]{0}', space=vmem, size = 0x5000, scoped, tag = 'input window, operand 2, single buffered']
    #allocation8 [shape = 'u8[196608]{0}', space=vmem, size = 0x30000, scoped, tag = 'input window, operand 4, single buffered']
    #allocation9 [shape = 's32[1]{0}', space=sflag, size = 0x4, scoped, tag = 'scoped memory for tpu_custom_call.1']
    #allocation10 [shape = 'u8[65536]{0}', space=vmem, size = 0x10000, scoped, tag = 'input window, operand 6, single buffered']
    #allocation11 [shape = 'u8[131072]{0}', space=vmem, size = 0x20000, scoped, tag = 'input window, operand 10, single buffered']
    #allocation12 [shape = 's32[1]{0}', space=sflag, size = 0x4, scoped, tag = 'scoped memory for tpu_custom_call.1']
    #allocation13 [shape = 'u8[131072]{0}', space=vmem, size = 0x20000, scoped, tag = 'input window, operand 12, single buffered']
    #allocation14 [shape = 'u8[1024]{0}', space=vmem, size = 0x400, scoped, tag = 'output window, operand 0, single buffered']
    %21 = vsyncpa [#allocation3], 0
    %22 = vsyncpa [#allocation6], 0
    %23 = vsyncpa [#allocation9], 0
    %24 = vsyncpa [#allocation12], 0
    %25 = vsyncpa [#allocation4], 0
    // Predicated region
    $region2: #{tpu_custom_call.1} parent=1 // pred_check
      _
    $region3: #{tpu_custom_call.1} parent=1 // pred_check_branch
      %27 = sbr.rel (0) target = $region5
    $region4: #{tpu_custom_call.1} parent=1 // pred_region
      %s29 = ssub.s32 256, 256
      %30 = vsyncadd [#allocation3], %s29
      %s31 = sshll.u32 [#allocation2], 4
      %s32 = int_to_ptr.vmem [resolvable:$true] %s31
      %37 = dma.hbm_to_vmem [thread:$0]  %s0, 256, %s32, [#allocation3], 128, 128, 8
    $region5: #{tpu_custom_call.1} parent=1 // pred_fallthru
      _
    // Predicated region
    $region6: #{tpu_custom_call.1} parent=1 // pred_check
      _
    $region7: #{tpu_custom_call.1} parent=1 // pred_check_branch
      %39 = sbr.rel (0) target = $region9
    $region8: #{tpu_custom_call.1} parent=1 // pred_region
      %s41 = ssub.s32 128, 128
      %42 = vsyncadd [#allocation6], %s41
      %s44 = sshll.u32 [#allocation5], 4
      %s45 = int_to_ptr.vmem [resolvable:$true] %s44
      %47 = dma.hbm_to_vmem [thread:$0]  %s1, 128, %s45, [#allocation6]
    $region9: #{tpu_custom_call.1} parent=1 // pred_fallthru
      _
    // Predicated region
    $region10: #{tpu_custom_call.1} parent=1 // pred_check
      _
    $region11: #{tpu_custom_call.1} parent=1 // pred_check_branch
      %49 = sbr.rel (0) target = $region13
    $region12: #{tpu_custom_call.1} parent=1 // pred_region
      %s51 = ssub.s32 640, 640
      %52 = vsyncadd [#allocation6], %s51
      %s53 = sshll.u32 [#allocation7], 4
      %s54 = int_to_ptr.vmem [resolvable:$true] %s53
      %59 = dma.hbm_to_vmem [thread:$0]  %s2, 640, %s54, [#allocation6], 128, 128, 8
    $region13: #{tpu_custom_call.1} parent=1 // pred_fallthru
      _
    // Predicated region
    $region14: #{tpu_custom_call.1} parent=1 // pred_check
      _
    $region15: #{tpu_custom_call.1} parent=1 // pred_check_branch
      %61 = sbr.rel (0) target = $region17
    $region16: #{tpu_custom_call.1} parent=1 // pred_region
      _
    $region17: #{tpu_custom_call.1} parent=1 // pred_fallthru
      _
    // Predicated region
    $region18: #{tpu_custom_call.1} parent=1 // pred_check
      _
    $region19: #{tpu_custom_call.1} parent=1 // pred_check_branch
      %63 = sbr.rel (0) target = $region21
    $region20: #{tpu_custom_call.1} parent=1 // pred_region
      %s65 = ssub.s32 6144, 6144
      %66 = vsyncadd [#allocation9], %s65
      %s67 = sshll.u32 [#allocation8], 4
      %s68 = int_to_ptr.vmem [resolvable:$true] %s67
      %73 = dma.hbm_to_vmem [thread:$0]  %s4, 6144, %s68, [#allocation9], 384, 384, 24
    $region21: #{tpu_custom_call.1} parent=1 // pred_fallthru
      _
    // Predicated region
    $region22: #{tpu_custom_call.1} parent=1 // pred_check
      _
    $region23: #{tpu_custom_call.1} parent=1 // pred_check_branch
      %75 = sbr.rel (0) target = $region25
    $region24: #{tpu_custom_call.1} parent=1 // pred_region
      _
    $region25: #{tpu_custom_call.1} parent=1 // pred_fallthru
      _
    // Predicated region
    $region26: #{tpu_custom_call.1} parent=1 // pred_check
      _
    $region27: #{tpu_custom_call.1} parent=1 // pred_check_branch
      %77 = sbr.rel (0) target = $region29
    $region28: #{tpu_custom_call.1} parent=1 // pred_region
      %s79 = ssub.s32 2048, 2048
      %80 = vsyncadd [#allocation9], %s79
      %s81 = sshll.u32 [#allocation10], 4
      %s82 = int_to_ptr.vmem [resolvable:$true] %s81
      %87 = dma.hbm_to_vmem [thread:$0]  %s6, 2048, %s82, [#allocation9], 128, 128, 8
    $region29: #{tpu_custom_call.1} parent=1 // pred_fallthru
      _
    // Predicated region
    $region30: #{tpu_custom_call.1} parent=1 // pred_check
      _
    $region31: #{tpu_custom_call.1} parent=1 // pred_check_branch
      %89 = sbr.rel (0) target = $region33
    $region32: #{tpu_custom_call.1} parent=1 // pred_region
      _
    $region33: #{tpu_custom_call.1} parent=1 // pred_fallthru
      _
    // Predicated region
    $region34: #{tpu_custom_call.1} parent=1 // pred_check
      _
    $region35: #{tpu_custom_call.1} parent=1 // pred_check_branch
      %91 = sbr.rel (0) target = $region37
    $region36: #{tpu_custom_call.1} parent=1 // pred_region
      _
    $region37: #{tpu_custom_call.1} parent=1 // pred_fallthru
      _
    // Predicated region
    $region38: #{tpu_custom_call.1} parent=1 // pred_check
      _
    $region39: #{tpu_custom_call.1} parent=1 // pred_check_branch
      %93 = sbr.rel (0) target = $region41
    $region40: #{tpu_custom_call.1} parent=1 // pred_region
      _
    $region41: #{tpu_custom_call.1} parent=1 // pred_fallthru
      _
    // Predicated region
    $region42: #{tpu_custom_call.1} parent=1 // pred_check
      _
    $region43: #{tpu_custom_call.1} parent=1 // pred_check_branch
      %95 = sbr.rel (0) target = $region45
    $region44: #{tpu_custom_call.1} parent=1 // pred_region
      %s97 = ssub.s32 4096, 4096
      %98 = vsyncadd [#allocation12], %s97
      %s99 = sshll.u32 [#allocation11], 4
      %s100 = int_to_ptr.vmem [resolvable:$true] %s99
      %105 = dma.hbm_to_vmem [thread:$0]  %s10, 4096, %s100, [#allocation12], 256, 256, 16
    $region45: #{tpu_custom_call.1} parent=1 // pred_fallthru
      _
    // Predicated region
    $region46: #{tpu_custom_call.1} parent=1 // pred_check
      _
    $region47: #{tpu_custom_call.1} parent=1 // pred_check_branch
      %107 = sbr.rel (0) target = $region49
    $region48: #{tpu_custom_call.1} parent=1 // pred_region
      _
    $region49: #{tpu_custom_call.1} parent=1 // pred_fallthru
      _
    // Predicated region
    $region50: #{tpu_custom_call.1} parent=1 // pred_check
      _
    $region51: #{tpu_custom_call.1} parent=1 // pred_check_branch
      %109 = sbr.rel (0) target = $region53
    $region52: #{tpu_custom_call.1} parent=1 // pred_region
      %s111 = ssub.s32 4096, 4096
      %112 = vsyncadd [#allocation12], %s111
      %s113 = sshll.u32 [#allocation13], 4
      %s114 = int_to_ptr.vmem [resolvable:$true] %s113
      %119 = dma.hbm_to_vmem [thread:$0]  %s12, 4096, %s114, [#allocation12], 128, 128, 8
    $region53: #{tpu_custom_call.1} parent=1 // pred_fallthru
      _
    // Predicated region
    $region54: #{tpu_custom_call.1} parent=1 // pred_check
      _
    $region55: #{tpu_custom_call.1} parent=1 // pred_check_branch
      %121 = sbr.rel (0) target = $region57
    $region56: #{tpu_custom_call.1} parent=1 // pred_region
      _
    $region57: #{tpu_custom_call.1} parent=1 // pred_fallthru
      _
    // Predicated region
    $region58: #{tpu_custom_call.1} parent=1 // pred_check
      _
    $region59: #{tpu_custom_call.1} parent=1 // pred_check_branch
      %123 = sbr.rel (0) target = $region61
    $region60: #{tpu_custom_call.1} parent=1 // pred_region
      _
    $region61: #{tpu_custom_call.1} parent=1 // pred_fallthru
      _
    // Predicated region
    $region62: #{tpu_custom_call.1} parent=1 // pred_check
      _
    $region63: #{tpu_custom_call.1} parent=1 // pred_check_branch
      %125 = sbr.rel (0) target = $region65
    $region64: #{tpu_custom_call.1} parent=1 // pred_region
      _
    $region65: #{tpu_custom_call.1} parent=1 // pred_fallthru
      _
    // Predicated region
    $region66: #{tpu_custom_call.1} parent=1 // pred_check
      _
    $region67: #{tpu_custom_call.1} parent=1 // pred_check_branch
      %127 = sbr.rel (0) target = $region69
    $region68: #{tpu_custom_call.1} parent=1 // pred_region
      %128 = dma.done [#allocation3], 256
    $region69: #{tpu_custom_call.1} parent=1 // pred_fallthru
      _
    // Predicated region
    $region70: #{tpu_custom_call.1} parent=1 // pred_check
      _
    $region71: #{tpu_custom_call.1} parent=1 // pred_check_branch
      %130 = sbr.rel (0) target = $region73
    $region72: #{tpu_custom_call.1} parent=1 // pred_region
      %131 = dma.done [#allocation6], 128
    $region73: #{tpu_custom_call.1} parent=1 // pred_fallthru
      _
    // Predicated region
    $region74: #{tpu_custom_call.1} parent=1 // pred_check
      _
    $region75: #{tpu_custom_call.1} parent=1 // pred_check_branch
      %133 = sbr.rel (0) target = $region77
    $region76: #{tpu_custom_call.1} parent=1 // pred_region
      %134 = dma.done [#allocation6], 640
    $region77: #{tpu_custom_call.1} parent=1 // pred_fallthru
      _
    // Predicated region
    $region78: #{tpu_custom_call.1} parent=1 // pred_check
      _
    $region79: #{tpu_custom_call.1} parent=1 // pred_check_branch
      %136 = sbr.rel (0) target = $region81
    $region80: #{tpu_custom_call.1} parent=1 // pred_region
      %137 = dma.done [#allocation9], 6144
    $region81: #{tpu_custom_call.1} parent=1 // pred_fallthru
      _
    // Predicated region
    $region82: #{tpu_custom_call.1} parent=1 // pred_check
      _
    $region83: #{tpu_custom_call.1} parent=1 // pred_check_branch
      %139 = sbr.rel (0) target = $region85
    $region84: #{tpu_custom_call.1} parent=1 // pred_region
      %140 = dma.done [#allocation9], 2048
    $region85: #{tpu_custom_call.1} parent=1 // pred_fallthru
      _
    // Predicated region
    $region86: #{tpu_custom_call.1} parent=1 // pred_check
      _
    $region87: #{tpu_custom_call.1} parent=1 // pred_check_branch
      %142 = sbr.rel (0) target = $region89
    $region88: #{tpu_custom_call.1} parent=1 // pred_region
      %143 = dma.done [#allocation12], 4096
    $region89: #{tpu_custom_call.1} parent=1 // pred_fallthru
      _
    // Predicated region
    $region90: #{tpu_custom_call.1} parent=1 // pred_check
      _
    $region91: #{tpu_custom_call.1} parent=1 // pred_check_branch
      %145 = sbr.rel (0) target = $region93
    $region92: #{tpu_custom_call.1} parent=1 // pred_region
      %146 = dma.done [#allocation12], 4096
    $region93: #{tpu_custom_call.1} parent=1 // pred_fallthru
      _
    %v147 = vlaneseq
    %v148 = vand.u32 %v147, 127
    %vm149 = vcmp.lt.s32.totalorder %v148, 100
    %v150 = vsel %vm149, 1, 0
    %v151 = vcvt.s32.f32 %v150
    %v152 = vld [vmem:[#allocation2] sm:$0xff]
    %v153 = vld [vmem:[#allocation2 + $0x8] sm:$0xff]
    %v154 = vld [vmem:[#allocation7] sm:$0xff]
    %v155 = vld [vmem:[#allocation7 + $0x8] sm:$0xff]
    %v156 = vld [vmem:[#allocation7 + $0x10] sm:$0xff]
    %v157 = vld [vmem:[#allocation7 + $0x18] sm:$0xff]
    %v158 = vld [vmem:[#allocation7 + $0x20] sm:$0xff]
    %v159 = vld [vmem:[%s3] sm:$0x1]
    %v161 = vlaneseq
    %v162 = vshrl.u32 %v161, 7
    %v163 = vsub.s32 0, %v162
    %v164 = vrot.slane %v159, %v163
    %vm166 = vcmask 326656
    %v168 = vsel %vm166, %v152, 0
    %v171 = vsel %vm166, %v153, 0
    %173 = vmatprep.subr.mxu0 0.0
    %174 = vmatpush1.msra.mxu0 %v154
    %175 = vmatprep.subr.mxu0 0.0
    %176 = vmatpush1.msra.mxu0 %v155
    %177 = vmatprep.subr.mxu0 0.0
    %178 = vmatpush1.msra.mxu0 %v156
    %179 = vmatprep.subr.mxu0 0.0
    %180 = vmatpush1.msra.mxu0 %v157
    %181 = vmatprep.subr.mxu0 0.0
    %182 = vmatpush1.msra.mxu0 %v158
    %183 = vmatprep.subr.mxu0 0.0
    %184 = vmatpush1.msra.mxu0 0.0
    %185 = vmatprep.subr.mxu0 0.0
    %186 = vmatpush1.msra.mxu0 0.0
    %187 = vmatprep.subr.mxu0 0.0
    %188 = vmatpush1.msra.mxu0 0.0
    %189 = vmatprep.subr.mxu0 0.0
    %190 = vmatpush1.msra.mxu0 0.0
    %191 = vmatprep.subr.mxu0 0.0
    %192 = vmatpush1.msra.mxu0 0.0
    %193 = vmatprep.subr.mxu0 0.0
    %194 = vmatpush1.msra.mxu0 0.0
    %195 = vmatprep.subr.mxu0 0.0
    %196 = vmatpush1.msra.mxu0 0.0
    %197 = vmatprep.subr.mxu0 0.0
    %198 = vmatpush1.msra.mxu0 0.0
    %199 = vmatprep.subr.mxu0 0.0
    %200 = vmatpush1.msra.mxu0 0.0
    %201 = vmatprep.subr.mxu0 0.0
    %202 = vmatpush1.msra.mxu0 0.0
    %203 = vmatprep.subr.mxu0 0.0
    %204 = vmatpush1.msra.mxu0 0.0
    %205 = vmatprep.subr.mxu0 0.0
    %206 = vmatpush1.msra.mxu0 0.0
    %207 = vmatprep.subr.mxu0 0.0
    %208 = vmatpush1.msra.mxu0 0.0
    %209 = vmatprep.subr.mxu0 0.0
    %210 = vmatpush1.msra.mxu0 0.0
    %211 = vmatprep.subr.mxu0 0.0
    %212 = vmatpush1.msra.mxu0 0.0
    %213 = vmatprep.subr.mxu0 0.0
    %214 = vmatpush1.msra.mxu0 0.0
    %215 = vmatprep.subr.mxu0 0.0
    %216 = vmatpush1.msra.mxu0 0.0
    %217 = vmatprep.subr.mxu0 0.0
    %218 = vmatpush1.msra.mxu0 0.0
    %219 = vmatprep.subr.mxu0 0.0
    %220 = vmatpush1.msra.mxu0 0.0
    %221 = vmatprep.subr.mxu0 0.0
    %222 = vmatpush1.msra.mxu0 0.0
    %223 = vmatprep.subr.mxu0 0.0
    %224 = vmatpush1.msra.mxu0 0.0
    %225 = vmatprep.subr.mxu0 0.0
    %226 = vmatpush1.msra.mxu0 0.0
    %227 = vmatprep.subr.mxu0 0.0
    %228 = vmatpush1.msra.mxu0 0.0
    %229 = vmatprep.subr.mxu0 0.0
    %230 = vmatpush1.msra.mxu0 0.0
    %231 = vmatprep.subr.mxu0 0.0
    %232 = vmatpush1.msra.mxu0 0.0
    %233 = vmatprep.subr.mxu0 0.0
    %234 = vmatpush1.msra.mxu0 0.0
    %235 = vmatprep.subr.mxu0 0.0
    %236 = vmatpush1.msra.mxu0 0.0
    %237 = vmatprep.mubr.f32.mxu0 0.0
    %238 = vmatmul.mubr.f32.gmra.mrb[0].mxu0 %v168
    %v239 = vpop.f32.mrb[0].mxu0
    %v240 = vadd.f32 %v164, %v239
    %v241 = vpop.f32.mrb[0].mxu0
    %242 = vmatprep.mubr.f32.mxu0 0.0
    %243 = vmatmul.mubr.f32.gmra.mrb[0].mxu0 %v171
    %v244 = vpop.f32.mrb[0].mxu0
    %v245 = vadd.f32 %v164, %v244
    %v246 = vpop.f32.mrb[0].mxu0
    %247 = vdwg.mxu0
    %v248 = vld [vmem:[#allocation5] sm:$0xff]
    %v249 = vadd.f32 %v240, %v248
    %v250 = vadd.f32 %v245, %v248
    %v251 = vld [vmem:[#allocation8] sm:$0xff]
    %v252 = vld [vmem:[#allocation8 + $0x8] sm:$0xff]
    %v253 = vld [vmem:[#allocation8 + $0x10] sm:$0xff]
    %v254 = vld [vmem:[#allocation8 + $0x18] sm:$0xff]
    %v255 = vld [vmem:[#allocation8 + $0x20] sm:$0xff]
    %v256 = vld [vmem:[#allocation8 + $0x28] sm:$0xff]
    %v257 = vld [vmem:[#allocation8 + $0x30] sm:$0xff]
    %v258 = vld [vmem:[#allocation8 + $0x38] sm:$0xff]
    %v259 = vld [vmem:[#allocation8 + $0x40] sm:$0xff]
    %v260 = vld [vmem:[#allocation8 + $0x48] sm:$0xff]
    %v261 = vld [vmem:[#allocation8 + $0x50] sm:$0xff]
    %v262 = vld [vmem:[#allocation8 + $0x58] sm:$0xff]
    %v263 = vld [vmem:[#allocation8 + $0x60] sm:$0xff]
    %v264 = vld [vmem:[#allocation8 + $0x68] sm:$0xff]
    %v265 = vld [vmem:[#allocation8 + $0x70] sm:$0xff]
    %v266 = vld [vmem:[#allocation8 + $0x78] sm:$0xff]
    %v267 = vld [vmem:[#allocation8 + $0x80] sm:$0xff]
    %v268 = vld [vmem:[#allocation8 + $0x88] sm:$0xff]
    %v269 = vld [vmem:[#allocation8 + $0x90] sm:$0xff]
    %v270 = vld [vmem:[#allocation8 + $0x98] sm:$0xff]
    %v271 = vld [vmem:[#allocation8 + $0xa0] sm:$0xff]
    %v272 = vld [vmem:[#allocation8 + $0xa8] sm:$0xff]
    %v273 = vld [vmem:[#allocation8 + $0xb0] sm:$0xff]
    %v274 = vld [vmem:[#allocation8 + $0xb8] sm:$0xff]
    %v275 = vld [vmem:[#allocation8 + $0xc0] sm:$0xff]
    %v276 = vld [vmem:[#allocation8 + $0xc8] sm:$0xff]
    %v277 = vld [vmem:[#allocation8 + $0xd0] sm:$0xff]
    %v278 = vld [vmem:[#allocation8 + $0xd8] sm:$0xff]
    %v279 = vld [vmem:[#allocation8 + $0xe0] sm:$0xff]
    %v280 = vld [vmem:[#allocation8 + $0xe8] sm:$0xff]
    %v281 = vld [vmem:[#allocation8 + $0xf0] sm:$0xff]
    %v282 = vld [vmem:[#allocation8 + $0xf8] sm:$0xff]
    %v283 = vld [vmem:[#allocation8 + $0x100] sm:$0xff]
    %v284 = vld [vmem:[#allocation8 + $0x108] sm:$0xff]
    %v285 = vld [vmem:[#allocation8 + $0x110] sm:$0xff]
    %v286 = vld [vmem:[#allocation8 + $0x118] sm:$0xff]
    %v287 = vld [vmem:[#allocation8 + $0x120] sm:$0xff]
    %v288 = vld [vmem:[#allocation8 + $0x128] sm:$0xff]
    %v289 = vld [vmem:[#allocation8 + $0x130] sm:$0xff]
    %v290 = vld [vmem:[#allocation8 + $0x138] sm:$0xff]
    %v291 = vld [vmem:[#allocation8 + $0x140] sm:$0xff]
    %v292 = vld [vmem:[#allocation8 + $0x148] sm:$0xff]
    %v293 = vld [vmem:[#allocation8 + $0x150] sm:$0xff]
    %v294 = vld [vmem:[#allocation8 + $0x158] sm:$0xff]
    %v295 = vld [vmem:[#allocation8 + $0x160] sm:$0xff]
    %v296 = vld [vmem:[#allocation8 + $0x168] sm:$0xff]
    %v297 = vld [vmem:[#allocation8 + $0x170] sm:$0xff]
    %v298 = vld [vmem:[#allocation8 + $0x178] sm:$0xff]
    %v299 = vld [vmem:[%s5] sm:$0x7]
    %v301 = vlaneseq
    %v302 = vshrl.u32 %v301, 7
    %v303 = vsub.s32 0, %v302
    %v304 = vrot.slane %v299, %v303
    %v305 = vlaneseq
    %v306 = vshrl.u32 %v305, 7
    %v307 = vsub.s32 1, %v306
    %v308 = vrot.slane %v299, %v307
    %v309 = vlaneseq
    %v310 = vshrl.u32 %v309, 7
    %v311 = vsub.s32 2, %v310
    %v312 = vrot.slane %v299, %v311
    %316 = vmatprep.subr.mxu0 %v252
    %317 = vmatpush1.msra.mxu0 %v251
    %318 = vmatprep.subr.mxu0 %v255
    %319 = vmatpush1.msra.mxu0 %v254
    %320 = vmatprep.subr.mxu0 %v258
    %321 = vmatpush1.msra.mxu0 %v257
    %322 = vmatprep.subr.mxu0 %v261
    %323 = vmatpush1.msra.mxu0 %v260
    %324 = vmatprep.subr.mxu0 %v264
    %325 = vmatpush1.msra.mxu0 %v263
    %326 = vmatprep.subr.mxu0 %v267
    %327 = vmatpush1.msra.mxu0 %v266
    %328 = vmatprep.subr.mxu0 %v270
    %329 = vmatpush1.msra.mxu0 %v269
    %330 = vmatprep.subr.mxu0 %v273
    %331 = vmatpush1.msra.mxu0 %v272
    %332 = vmatprep.subr.mxu0 %v276
    %333 = vmatpush1.msra.mxu0 %v275
    %334 = vmatprep.subr.mxu0 %v279
    %335 = vmatpush1.msra.mxu0 %v278
    %336 = vmatprep.subr.mxu0 %v282
    %337 = vmatpush1.msra.mxu0 %v281
    %338 = vmatprep.subr.mxu0 %v285
    %339 = vmatpush1.msra.mxu0 %v284
    %340 = vmatprep.subr.mxu0 %v288
    %341 = vmatpush1.msra.mxu0 %v287
    %342 = vmatprep.subr.mxu0 %v291
    %343 = vmatpush1.msra.mxu0 %v290
    %344 = vmatprep.subr.mxu0 %v294
    %345 = vmatpush1.msra.mxu0 %v293
    %346 = vmatprep.subr.mxu0 %v297
    %347 = vmatpush1.msra.mxu0 %v296
    %348 = vmatprep.subr.mxu0 0.0
    %349 = vmatpush1.msra.mxu0 0.0
    %350 = vmatprep.subr.mxu0 0.0
    %351 = vmatpush1.msra.mxu0 0.0
    %352 = vmatprep.subr.mxu0 0.0
    %353 = vmatpush1.msra.mxu0 0.0
    %354 = vmatprep.subr.mxu0 0.0
    %355 = vmatpush1.msra.mxu0 0.0
    %356 = vmatprep.subr.mxu0 0.0
    %357 = vmatpush1.msra.mxu0 0.0
    %358 = vmatprep.subr.mxu0 0.0
    %359 = vmatpush1.msra.mxu0 0.0
    %360 = vmatprep.subr.mxu0 0.0
    %361 = vmatpush1.msra.mxu0 0.0
    %362 = vmatprep.subr.mxu0 0.0
    %363 = vmatpush1.msra.mxu0 0.0
    %364 = vmatprep.subr.mxu0 0.0
    %365 = vmatpush1.msra.mxu0 0.0
    %366 = vmatprep.subr.mxu0 0.0
    %367 = vmatpush1.msra.mxu0 0.0
    %368 = vmatprep.subr.mxu0 0.0
    %369 = vmatpush1.msra.mxu0 0.0
    %370 = vmatprep.subr.mxu0 0.0
    %371 = vmatpush1.msra.mxu0 0.0
    %372 = vmatprep.subr.mxu0 0.0
    %373 = vmatpush1.msra.mxu0 0.0
    %374 = vmatprep.subr.mxu0 0.0
    %375 = vmatpush1.msra.mxu0 0.0
    %376 = vmatprep.subr.mxu0 0.0
    %377 = vmatpush1.msra.mxu0 0.0
    %378 = vmatprep.subr.mxu0 0.0
    %379 = vmatpush1.msra.mxu0 0.0
    %380 = vmatprep.mubr.f32.mxu0 0.0
    %381 = vmatmul.mubr.f32.gmra.mrb[0].mxu0 %v249
    %v382 = vpop.f32.mrb[0].mxu0
    %v383 = vadd.f32 %v304, %v382
    %v384 = vpop.f32.mrb[0].mxu0
    %v385 = vadd.f32 %v308, %v384
    %386 = vmatprep.mubr.f32.mxu0 0.0
    %387 = vmatmul.mubr.f32.gmra.mrb[0].mxu0 %v250
    %v388 = vpop.f32.mrb[0].mxu0
    %v389 = vadd.f32 %v304, %v388
    %v390 = vpop.f32.mrb[0].mxu0
    %v391 = vadd.f32 %v308, %v390
    %392 = vdwg.mxu0
    %393 = vmatprep.subr.mxu0 0.0
    %394 = vmatpush1.msra.mxu0 %v253
    %395 = vmatprep.subr.mxu0 0.0
    %396 = vmatpush1.msra.mxu0 %v256
    %397 = vmatprep.subr.mxu0 0.0
    %398 = vmatpush1.msra.mxu0 %v259
    %399 = vmatprep.subr.mxu0 0.0
    %400 = vmatpush1.msra.mxu0 %v262
    %401 = vmatprep.subr.mxu0 0.0
    %402 = vmatpush1.msra.mxu0 %v265
    %403 = vmatprep.subr.mxu0 0.0
    %404 = vmatpush1.msra.mxu0 %v268
    %405 = vmatprep.subr.mxu0 0.0
    %406 = vmatpush1.msra.mxu0 %v271
    %407 = vmatprep.subr.mxu0 0.0
    %408 = vmatpush1.msra.mxu0 %v274
    %409 = vmatprep.subr.mxu0 0.0
    %410 = vmatpush1.msra.mxu0 %v277
    %411 = vmatprep.subr.mxu0 0.0
    %412 = vmatpush1.msra.mxu0 %v280
    %413 = vmatprep.subr.mxu0 0.0
    %414 = vmatpush1.msra.mxu0 %v283
    %415 = vmatprep.subr.mxu0 0.0
    %416 = vmatpush1.msra.mxu0 %v286
    %417 = vmatprep.subr.mxu0 0.0
    %418 = vmatpush1.msra.mxu0 %v289
    %419 = vmatprep.subr.mxu0 0.0
    %420 = vmatpush1.msra.mxu0 %v292
    %421 = vmatprep.subr.mxu0 0.0
    %422 = vmatpush1.msra.mxu0 %v295
    %423 = vmatprep.subr.mxu0 0.0
    %424 = vmatpush1.msra.mxu0 %v298
    %425 = vmatprep.subr.mxu0 0.0
    %426 = vmatpush1.msra.mxu0 0.0
    %427 = vmatprep.subr.mxu0 0.0
    %428 = vmatpush1.msra.mxu0 0.0
    %429 = vmatprep.subr.mxu0 0.0
    %430 = vmatpush1.msra.mxu0 0.0
    %431 = vmatprep.subr.mxu0 0.0
    %432 = vmatpush1.msra.mxu0 0.0
    %433 = vmatprep.subr.mxu0 0.0
    %434 = vmatpush1.msra.mxu0 0.0
    %435 = vmatprep.subr.mxu0 0.0
    %436 = vmatpush1.msra.mxu0 0.0
    %437 = vmatprep.subr.mxu0 0.0
    %438 = vmatpush1.msra.mxu0 0.0
    %439 = vmatprep.subr.mxu0 0.0
    %440 = vmatpush1.msra.mxu0 0.0
    %441 = vmatprep.subr.mxu0 0.0
    %442 = vmatpush1.msra.mxu0 0.0
    %443 = vmatprep.subr.mxu0 0.0
    %444 = vmatpush1.msra.mxu0 0.0
    %445 = vmatprep.subr.mxu0 0.0
    %446 = vmatpush1.msra.mxu0 0.0
    %447 = vmatprep.subr.mxu0 0.0
    %448 = vmatpush1.msra.mxu0 0.0
    %449 = vmatprep.subr.mxu0 0.0
    %450 = vmatpush1.msra.mxu0 0.0
    %451 = vmatprep.subr.mxu0 0.0
    %452 = vmatpush1.msra.mxu0 0.0
    %453 = vmatprep.subr.mxu0 0.0
    %454 = vmatpush1.msra.mxu0 0.0
    %455 = vmatprep.subr.mxu0 0.0
    %456 = vmatpush1.msra.mxu0 0.0
    %457 = vmatprep.mubr.f32.mxu0 0.0
    %458 = vmatmul.mubr.f32.gmra.mrb[0].mxu0 %v249
    %v459 = vpop.f32.mrb[0].mxu0
    %v460 = vadd.f32 %v312, %v459
    %v461 = vpop.f32.mrb[0].mxu0
    %462 = vmatprep.mubr.f32.mxu0 0.0
    %463 = vmatmul.mubr.f32.gmra.mrb[0].mxu0 %v250
    %v464 = vpop.f32.mrb[0].mxu0
    %v465 = vadd.f32 %v312, %v464
    %v466 = vpop.f32.mrb[0].mxu0
    %467 = vdwg.mxu0
    %468 = vmatprep.subr.mxu0 0.0
    %469 = vmatpush1.xpose.msra.mxu0 %v385
    %470 = vmatprep.subr.mxu0 0.0
    %471 = vmatpush1.xpose.msra.mxu0 0.0
    %472 = vmatprep.subr.mxu0 0.0
    %473 = vmatpush1.xpose.msra.mxu0 0.0
    %474 = vmatprep.subr.mxu0 0.0
    %475 = vmatpush1.xpose.msra.mxu0 0.0
    %476 = vmatprep.subr.mxu0 0.0
    %477 = vmatpush1.xpose.msra.mxu0 0.0
    %478 = vmatprep.subr.mxu0 0.0
    %479 = vmatpush1.xpose.msra.mxu0 0.0
    %480 = vmatprep.subr.mxu0 0.0
    %481 = vmatpush1.xpose.msra.mxu0 0.0
    %482 = vmatprep.subr.mxu0 0.0
    %483 = vmatpush1.xpose.msra.mxu0 0.0
    %484 = vmatprep.subr.mxu0 0.0
    %485 = vmatpush1.xpose.msra.mxu0 0.0
    %486 = vmatprep.subr.mxu0 0.0
    %487 = vmatpush1.xpose.msra.mxu0 0.0
    %488 = vmatprep.subr.mxu0 0.0
    %489 = vmatpush1.xpose.msra.mxu0 0.0
    %490 = vmatprep.subr.mxu0 0.0
    %491 = vmatpush1.xpose.msra.mxu0 0.0
    %492 = vmatprep.subr.mxu0 0.0
    %493 = vmatpush1.xpose.msra.mxu0 0.0
    %494 = vmatprep.subr.mxu0 0.0
    %495 = vmatpush1.xpose.msra.mxu0 0.0
    %496 = vmatprep.subr.mxu0 0.0
    %497 = vmatpush1.xpose.msra.mxu0 0.0
    %498 = vmatprep.subr.mxu0 0.0
    %499 = vmatpush1.xpose.msra.mxu0 0.0
    %500 = vmatprep.subr.mxu0 0.0
    %501 = vmatpush1.xpose.msra.mxu0 0.0
    %502 = vmatprep.subr.mxu0 0.0
    %503 = vmatpush1.xpose.msra.mxu0 0.0
    %504 = vmatprep.subr.mxu0 0.0
    %505 = vmatpush1.xpose.msra.mxu0 0.0
    %506 = vmatprep.subr.mxu0 0.0
    %507 = vmatpush1.xpose.msra.mxu0 0.0
    %508 = vmatprep.subr.mxu0 0.0
    %509 = vmatpush1.xpose.msra.mxu0 0.0
    %510 = vmatprep.subr.mxu0 0.0
    %511 = vmatpush1.xpose.msra.mxu0 0.0
    %512 = vmatprep.subr.mxu0 0.0
    %513 = vmatpush1.xpose.msra.mxu0 0.0
    %514 = vmatprep.subr.mxu0 0.0
    %515 = vmatpush1.xpose.msra.mxu0 0.0
    %516 = vmatprep.subr.mxu0 0.0
    %517 = vmatpush1.xpose.msra.mxu0 0.0
    %518 = vmatprep.subr.mxu0 0.0
    %519 = vmatpush1.xpose.msra.mxu0 0.0
    %520 = vmatprep.subr.mxu0 0.0
    %521 = vmatpush1.xpose.msra.mxu0 0.0
    %522 = vmatprep.subr.mxu0 0.0
    %523 = vmatpush1.xpose.msra.mxu0 0.0
    %524 = vmatprep.subr.mxu0 0.0
    %525 = vmatpush1.xpose.msra.mxu0 0.0
    %526 = vmatprep.subr.mxu0 0.0
    %527 = vmatpush1.xpose.msra.mxu0 0.0
    %528 = vmatprep.subr.mxu0 0.0
    %529 = vmatpush1.xpose.msra.mxu0 0.0
    %530 = vmatprep.subr.mxu0 0.0
    %531 = vmatpush1.xpose.msra.mxu0 0.0
    %532 = vmatprep.mubr.f32.mxu0 0.0
    %533 = vmatmul.mubr.f32.gmra.mrb[0].mxu0 %v383
    %v534 = vpop.f32.mrb[0].mxu0
    %v535 = vadd.f32 0.0, %v534
    %v536 = vpop.f32.mrb[0].mxu0
    %537 = vdwg.mxu0
    %538 = vmatprep.subr.mxu0 0.0
    %539 = vmatpush1.xpose.msra.mxu0 %v391
    %540 = vmatprep.subr.mxu0 0.0
    %541 = vmatpush1.xpose.msra.mxu0 0.0
    %542 = vmatprep.subr.mxu0 0.0
    %543 = vmatpush1.xpose.msra.mxu0 0.0
    %544 = vmatprep.subr.mxu0 0.0
    %545 = vmatpush1.xpose.msra.mxu0 0.0
    %546 = vmatprep.subr.mxu0 0.0
    %547 = vmatpush1.xpose.msra.mxu0 0.0
    %548 = vmatprep.subr.mxu0 0.0
    %549 = vmatpush1.xpose.msra.mxu0 0.0
    %550 = vmatprep.subr.mxu0 0.0
    %551 = vmatpush1.xpose.msra.mxu0 0.0
    %552 = vmatprep.subr.mxu0 0.0
    %553 = vmatpush1.xpose.msra.mxu0 0.0
    %554 = vmatprep.subr.mxu0 0.0
    %555 = vmatpush1.xpose.msra.mxu0 0.0
    %556 = vmatprep.subr.mxu0 0.0
    %557 = vmatpush1.xpose.msra.mxu0 0.0
    %558 = vmatprep.subr.mxu0 0.0
    %559 = vmatpush1.xpose.msra.mxu0 0.0
    %560 = vmatprep.subr.mxu0 0.0
    %561 = vmatpush1.xpose.msra.mxu0 0.0
    %562 = vmatprep.subr.mxu0 0.0
    %563 = vmatpush1.xpose.msra.mxu0 0.0
    %564 = vmatprep.subr.mxu0 0.0
    %565 = vmatpush1.xpose.msra.mxu0 0.0
    %566 = vmatprep.subr.mxu0 0.0
    %567 = vmatpush1.xpose.msra.mxu0 0.0
    %568 = vmatprep.subr.mxu0 0.0
    %569 = vmatpush1.xpose.msra.mxu0 0.0
    %570 = vmatprep.subr.mxu0 0.0
    %571 = vmatpush1.xpose.msra.mxu0 0.0
    %572 = vmatprep.subr.mxu0 0.0
    %573 = vmatpush1.xpose.msra.mxu0 0.0
    %574 = vmatprep.subr.mxu0 0.0
    %575 = vmatpush1.xpose.msra.mxu0 0.0
    %576 = vmatprep.subr.mxu0 0.0
    %577 = vmatpush1.xpose.msra.mxu0 0.0
    %578 = vmatprep.subr.mxu0 0.0
    %579 = vmatpush1.xpose.msra.mxu0 0.0
    %580 = vmatprep.subr.mxu0 0.0
    %581 = vmatpush1.xpose.msra.mxu0 0.0
    %582 = vmatprep.subr.mxu0 0.0
    %583 = vmatpush1.xpose.msra.mxu0 0.0
    %584 = vmatprep.subr.mxu0 0.0
    %585 = vmatpush1.xpose.msra.mxu0 0.0
    %586 = vmatprep.subr.mxu0 0.0
    %587 = vmatpush1.xpose.msra.mxu0 0.0
    %588 = vmatprep.subr.mxu0 0.0
    %589 = vmatpush1.xpose.msra.mxu0 0.0
    %590 = vmatprep.subr.mxu0 0.0
    %591 = vmatpush1.xpose.msra.mxu0 0.0
    %592 = vmatprep.subr.mxu0 0.0
    %593 = vmatpush1.xpose.msra.mxu0 0.0
    %594 = vmatprep.subr.mxu0 0.0
    %595 = vmatpush1.xpose.msra.mxu0 0.0
    %596 = vmatprep.subr.mxu0 0.0
    %597 = vmatpush1.xpose.msra.mxu0 0.0
    %598 = vmatprep.subr.mxu0 0.0
    %599 = vmatpush1.xpose.msra.mxu0 0.0
    %600 = vmatprep.subr.mxu0 0.0
    %601 = vmatpush1.xpose.msra.mxu0 0.0
    %602 = vmatprep.mubr.f32.mxu0 0.0
    %603 = vmatmul.mubr.f32.gmra.mrb[0].mxu0 %v389
    %v604 = vpop.f32.mrb[0].mxu0
    %v605 = vadd.f32 0.0, %v604
    %v606 = vpop.f32.mrb[0].mxu0
    %607 = vdwg.mxu0
    %v608 = vmul.f32 %v535, 0.1
    %v609 = vmul.f32 %v605, 0.1
    %vm610 = vcmask 64512
    %v611 = vsel %vm610, %v608, -inf
    %612 = vmax.xlane.f32.xlu0 %v611
    %v613 = vpop.xlane.xlu0 %612
    %v614 = vsel %vm610, %v609, -inf
    %615 = vmax.xlane.f32.xlu0 %v614
    %v616 = vpop.xlane.xlu0 %615
    %v617 = vsub.f32 %v608, %v613
    %v618 = vsub.f32 %v609, %v616
    %v619 = vmul.f32 %v617, 1.442695
    %v620 = vpow.pop %v619
    %v621 = vmul.f32 %v618, 1.442695
    %v622 = vpow.pop %v621
    %v623 = vsel %vm610, %v620, 0.0
    %624 = vadd.xlane.f32.xlu0 %v623
    %v625 = vpop.xlane.xlu0 %624
    %v626 = vsel %vm610, %v622, 0.0
    %627 = vadd.xlane.f32.xlu0 %v626
    %v628 = vpop.xlane.xlu0 %627
    %v629 = vrcp.pop %v625
    %v630 = vrcp.pop %v628
    %v631 = vmul.f32 %v620, %v629
    %v632 = vmul.f32 %v622, %v630
    %v634 = vsel %vm610, %v631, 0
    %636 = vmatprep.subr.mxu0 0.0
    %637 = vmatpush1.msra.mxu0 %v460
    %638 = vmatprep.subr.mxu0 0.0
    %639 = vmatpush1.msra.mxu0 0.0
    %640 = vmatprep.subr.mxu0 0.0
    %641 = vmatpush1.msra.mxu0 0.0
    %642 = vmatprep.subr.mxu0 0.0
    %643 = vmatpush1.msra.mxu0 0.0
    %644 = vmatprep.subr.mxu0 0.0
    %645 = vmatpush1.msra.mxu0 0.0
    %646 = vmatprep.subr.mxu0 0.0
    %647 = vmatpush1.msra.mxu0 0.0
    %648 = vmatprep.subr.mxu0 0.0
    %649 = vmatpush1.msra.mxu0 0.0
    %650 = vmatprep.subr.mxu0 0.0
    %651 = vmatpush1.msra.mxu0 0.0
    %652 = vmatprep.subr.mxu0 0.0
    %653 = vmatpush1.msra.mxu0 0.0
    %654 = vmatprep.subr.mxu0 0.0
    %655 = vmatpush1.msra.mxu0 0.0
    %656 = vmatprep.subr.mxu0 0.0
    %657 = vmatpush1.msra.mxu0 0.0
    %658 = vmatprep.subr.mxu0 0.0
    %659 = vmatpush1.msra.mxu0 0.0
    %660 = vmatprep.subr.mxu0 0.0
    %661 = vmatpush1.msra.mxu0 0.0
    %662 = vmatprep.subr.mxu0 0.0
    %663 = vmatpush1.msra.mxu0 0.0
    %664 = vmatprep.subr.mxu0 0.0
    %665 = vmatpush1.msra.mxu0 0.0
    %666 = vmatprep.subr.mxu0 0.0
    %667 = vmatpush1.msra.mxu0 0.0
    %668 = vmatprep.subr.mxu0 0.0
    %669 = vmatpush1.msra.mxu0 0.0
    %670 = vmatprep.subr.mxu0 0.0
    %671 = vmatpush1.msra.mxu0 0.0
    %672 = vmatprep.subr.mxu0 0.0
    %673 = vmatpush1.msra.mxu0 0.0
    %674 = vmatprep.subr.mxu0 0.0
    %675 = vmatpush1.msra.mxu0 0.0
    %676 = vmatprep.subr.mxu0 0.0
    %677 = vmatpush1.msra.mxu0 0.0
    %678 = vmatprep.subr.mxu0 0.0
    %679 = vmatpush1.msra.mxu0 0.0
    %680 = vmatprep.subr.mxu0 0.0
    %681 = vmatpush1.msra.mxu0 0.0
    %682 = vmatprep.subr.mxu0 0.0
    %683 = vmatpush1.msra.mxu0 0.0
    %684 = vmatprep.subr.mxu0 0.0
    %685 = vmatpush1.msra.mxu0 0.0
    %686 = vmatprep.subr.mxu0 0.0
    %687 = vmatpush1.msra.mxu0 0.0
    %688 = vmatprep.subr.mxu0 0.0
    %689 = vmatpush1.msra.mxu0 0.0
    %690 = vmatprep.subr.mxu0 0.0
    %691 = vmatpush1.msra.mxu0 0.0
    %692 = vmatprep.subr.mxu0 0.0
    %693 = vmatpush1.msra.mxu0 0.0
    %694 = vmatprep.subr.mxu0 0.0
    %695 = vmatpush1.msra.mxu0 0.0
    %696 = vmatprep.subr.mxu0 0.0
    %697 = vmatpush1.msra.mxu0 0.0
    %698 = vmatprep.subr.mxu0 0.0
    %699 = vmatpush1.msra.mxu0 0.0
    %700 = vmatprep.mubr.f32.mxu0 0.0
    %701 = vmatmul.mubr.f32.gmra.mrb[0].mxu0 %v634
    %v702 = vpop.f32.mrb[0].mxu0
    %v703 = vadd.f32 0.0, %v702
    %v704 = vpop.f32.mrb[0].mxu0
    %705 = vdwg.mxu0
    %v707 = vsel %vm610, %v632, 0
    %709 = vmatprep.subr.mxu0 0.0
    %710 = vmatpush1.msra.mxu0 %v465
    %711 = vmatprep.subr.mxu0 0.0
    %712 = vmatpush1.msra.mxu0 0.0
    %713 = vmatprep.subr.mxu0 0.0
    %714 = vmatpush1.msra.mxu0 0.0
    %715 = vmatprep.subr.mxu0 0.0
    %716 = vmatpush1.msra.mxu0 0.0
    %717 = vmatprep.subr.mxu0 0.0
    %718 = vmatpush1.msra.mxu0 0.0
    %719 = vmatprep.subr.mxu0 0.0
    %720 = vmatpush1.msra.mxu0 0.0
    %721 = vmatprep.subr.mxu0 0.0
    %722 = vmatpush1.msra.mxu0 0.0
    %723 = vmatprep.subr.mxu0 0.0
    %724 = vmatpush1.msra.mxu0 0.0
    %725 = vmatprep.subr.mxu0 0.0
    %726 = vmatpush1.msra.mxu0 0.0
    %727 = vmatprep.subr.mxu0 0.0
    %728 = vmatpush1.msra.mxu0 0.0
    %729 = vmatprep.subr.mxu0 0.0
    %730 = vmatpush1.msra.mxu0 0.0
    %731 = vmatprep.subr.mxu0 0.0
    %732 = vmatpush1.msra.mxu0 0.0
    %733 = vmatprep.subr.mxu0 0.0
    %734 = vmatpush1.msra.mxu0 0.0
    %735 = vmatprep.subr.mxu0 0.0
    %736 = vmatpush1.msra.mxu0 0.0
    %737 = vmatprep.subr.mxu0 0.0
    %738 = vmatpush1.msra.mxu0 0.0
    %739 = vmatprep.subr.mxu0 0.0
    %740 = vmatpush1.msra.mxu0 0.0
    %741 = vmatprep.subr.mxu0 0.0
    %742 = vmatpush1.msra.mxu0 0.0
    %743 = vmatprep.subr.mxu0 0.0
    %744 = vmatpush1.msra.mxu0 0.0
    %745 = vmatprep.subr.mxu0 0.0
    %746 = vmatpush1.msra.mxu0 0.0
    %747 = vmatprep.subr.mxu0 0.0
    %748 = vmatpush1.msra.mxu0 0.0
    %749 = vmatprep.subr.mxu0 0.0
    %750 = vmatpush1.msra.mxu0 0.0
    %751 = vmatprep.subr.mxu0 0.0
    %752 = vmatpush1.msra.mxu0 0.0
    %753 = vmatprep.subr.mxu0 0.0
    %754 = vmatpush1.msra.mxu0 0.0
    %755 = vmatprep.subr.mxu0 0.0
    %756 = vmatpush1.msra.mxu0 0.0
    %757 = vmatprep.subr.mxu0 0.0
    %758 = vmatpush1.msra.mxu0 0.0
    %759 = vmatprep.subr.mxu0 0.0
    %760 = vmatpush1.msra.mxu0 0.0
    %761 = vmatprep.subr.mxu0 0.0
    %762 = vmatpush1.msra.mxu0 0.0
    %763 = vmatprep.subr.mxu0 0.0
    %764 = vmatpush1.msra.mxu0 0.0
    %765 = vmatprep.subr.mxu0 0.0
    %766 = vmatpush1.msra.mxu0 0.0
    %767 = vmatprep.subr.mxu0 0.0
    %768 = vmatpush1.msra.mxu0 0.0
    %769 = vmatprep.subr.mxu0 0.0
    %770 = vmatpush1.msra.mxu0 0.0
    %771 = vmatprep.subr.mxu0 0.0
    %772 = vmatpush1.msra.mxu0 0.0
    %773 = vmatprep.mubr.f32.mxu0 0.0
    %774 = vmatmul.mubr.f32.gmra.mrb[0].mxu0 %v707
    %v775 = vpop.f32.mrb[0].mxu0
    %v776 = vadd.f32 0.0, %v775
    %v777 = vpop.f32.mrb[0].mxu0
    %778 = vdwg.mxu0
    %v779 = vld [vmem:[#allocation10] sm:$0xff]
    %v780 = vld [vmem:[#allocation10 + $0x8] sm:$0xff]
    %v781 = vld [vmem:[#allocation10 + $0x10] sm:$0xff]
    %v782 = vld [vmem:[#allocation10 + $0x18] sm:$0xff]
    %v783 = vld [vmem:[#allocation10 + $0x20] sm:$0xff]
    %v784 = vld [vmem:[#allocation10 + $0x28] sm:$0xff]
    %v785 = vld [vmem:[#allocation10 + $0x30] sm:$0xff]
    %v786 = vld [vmem:[#allocation10 + $0x38] sm:$0xff]
    %v787 = vld [vmem:[#allocation10 + $0x40] sm:$0xff]
    %v788 = vld [vmem:[#allocation10 + $0x48] sm:$0xff]
    %v789 = vld [vmem:[#allocation10 + $0x50] sm:$0xff]
    %v790 = vld [vmem:[#allocation10 + $0x58] sm:$0xff]
    %v791 = vld [vmem:[#allocation10 + $0x60] sm:$0xff]
    %v792 = vld [vmem:[#allocation10 + $0x68] sm:$0xff]
    %v793 = vld [vmem:[#allocation10 + $0x70] sm:$0xff]
    %v794 = vld [vmem:[#allocation10 + $0x78] sm:$0xff]
    %v795 = vld [vmem:[%s7] sm:$0x1]
    %v797 = vlaneseq
    %v798 = vshrl.u32 %v797, 7
    %v799 = vsub.s32 0, %v798
    %v800 = vrot.slane %v795, %v799
    %802 = vmatprep.subr.mxu0 0.0
    %803 = vmatpush1.msra.mxu0 %v779
    %804 = vmatprep.subr.mxu0 0.0
    %805 = vmatpush1.msra.mxu0 %v780
    %806 = vmatprep.subr.mxu0 0.0
    %807 = vmatpush1.msra.mxu0 %v781
    %808 = vmatprep.subr.mxu0 0.0
    %809 = vmatpush1.msra.mxu0 %v782
    %810 = vmatprep.subr.mxu0 0.0
    %811 = vmatpush1.msra.mxu0 %v783
    %812 = vmatprep.subr.mxu0 0.0
    %813 = vmatpush1.msra.mxu0 %v784
    %814 = vmatprep.subr.mxu0 0.0
    %815 = vmatpush1.msra.mxu0 %v785
    %816 = vmatprep.subr.mxu0 0.0
    %817 = vmatpush1.msra.mxu0 %v786
    %818 = vmatprep.subr.mxu0 0.0
    %819 = vmatpush1.msra.mxu0 %v787
    %820 = vmatprep.subr.mxu0 0.0
    %821 = vmatpush1.msra.mxu0 %v788
    %822 = vmatprep.subr.mxu0 0.0
    %823 = vmatpush1.msra.mxu0 %v789
    %824 = vmatprep.subr.mxu0 0.0
    %825 = vmatpush1.msra.mxu0 %v790
    %826 = vmatprep.subr.mxu0 0.0
    %827 = vmatpush1.msra.mxu0 %v791
    %828 = vmatprep.subr.mxu0 0.0
    %829 = vmatpush1.msra.mxu0 %v792
    %830 = vmatprep.subr.mxu0 0.0
    %831 = vmatpush1.msra.mxu0 %v793
    %832 = vmatprep.subr.mxu0 0.0
    %833 = vmatpush1.msra.mxu0 %v794
    %834 = vmatprep.subr.mxu0 0.0
    %835 = vmatpush1.msra.mxu0 0.0
    %836 = vmatprep.subr.mxu0 0.0
    %837 = vmatpush1.msra.mxu0 0.0
    %838 = vmatprep.subr.mxu0 0.0
    %839 = vmatpush1.msra.mxu0 0.0
    %840 = vmatprep.subr.mxu0 0.0
    %841 = vmatpush1.msra.mxu0 0.0
    %842 = vmatprep.subr.mxu0 0.0
    %843 = vmatpush1.msra.mxu0 0.0
    %844 = vmatprep.subr.mxu0 0.0
    %845 = vmatpush1.msra.mxu0 0.0
    %846 = vmatprep.subr.mxu0 0.0
    %847 = vmatpush1.msra.mxu0 0.0
    %848 = vmatprep.subr.mxu0 0.0
    %849 = vmatpush1.msra.mxu0 0.0
    %850 = vmatprep.subr.mxu0 0.0
    %851 = vmatpush1.msra.mxu0 0.0
    %852 = vmatprep.subr.mxu0 0.0
    %853 = vmatpush1.msra.mxu0 0.0
    %854 = vmatprep.subr.mxu0 0.0
    %855 = vmatpush1.msra.mxu0 0.0
    %856 = vmatprep.subr.mxu0 0.0
    %857 = vmatpush1.msra.mxu0 0.0
    %858 = vmatprep.subr.mxu0 0.0
    %859 = vmatpush1.msra.mxu0 0.0
    %860 = vmatprep.subr.mxu0 0.0
    %861 = vmatpush1.msra.mxu0 0.0
    %862 = vmatprep.subr.mxu0 0.0
    %863 = vmatpush1.msra.mxu0 0.0
    %864 = vmatprep.subr.mxu0 0.0
    %865 = vmatpush1.msra.mxu0 0.0
    %866 = vmatprep.mubr.f32.mxu0 0.0
    %867 = vmatmul.mubr.f32.gmra.mrb[0].mxu0 %v703
    %v868 = vpop.f32.mrb[0].mxu0
    %v869 = vadd.f32 %v800, %v868
    %v870 = vpop.f32.mrb[0].mxu0
    %871 = vmatprep.mubr.f32.mxu0 0.0
    %872 = vmatmul.mubr.f32.gmra.mrb[0].mxu0 %v776
    %v873 = vpop.f32.mrb[0].mxu0
    %v874 = vadd.f32 %v800, %v873
    %v875 = vpop.f32.mrb[0].mxu0
    %876 = vdwg.mxu0
    %v877 = vadd.f32 %v249, %v869
    %v878 = vadd.f32 %v250, %v874
    %v879 = vld [vmem:[%s8] sm:$0x1]
    %v880 = vld [vmem:[%s9] sm:$0x1]
    %881 = vadd.xlane.f32.xlu0 %v877
    %v882 = vpop.xlane.xlu0 %881
    %883 = vadd.xlane.f32.xlu0 %v878
    %v884 = vpop.xlane.xlu0 %883
    %v885 = vmul.f32 %v882, 0.01
    %v886 = vmul.f32 %v884, 0.01
    %v887 = vsub.f32 %v877, %v885
    %v888 = vsub.f32 %v878, %v886
    %v889 = vmul.f32 %v887, %v151
    %v890 = vmul.f32 %v888, %v151
    %v891 = vmul.f32 %v889, %v889
    %v892 = vmul.f32 %v890, %v890
    %893 = vadd.xlane.f32.xlu0 %v891
    %v894 = vpop.xlane.xlu0 %893
    %895 = vadd.xlane.f32.xlu0 %v892
    %v896 = vpop.xlane.xlu0 %895
    %v897 = vmul.f32 %v894, 0.01
    %v898 = vmul.f32 %v896, 0.01
    %v899 = vadd.f32 %v897, 1e-05
    %v900 = vadd.f32 %v898, 1e-05
    %v901 = vrsqrt.pop %v899
    %v902 = vrsqrt.pop %v900
    %v903 = vmul.f32 %v889, %v901
    %v904 = vmul.f32 %v890, %v902
    %v906 = vlaneseq
    %v907 = vshrl.u32 %v906, 7
    %v908 = vsub.s32 0, %v907
    %v909 = vrot.slane %v879, %v908
    %v911 = vmul.f32 %v903, %v909
    %v912 = vmul.f32 %v904, %v909
    %v914 = vlaneseq
    %v915 = vshrl.u32 %v914, 7
    %v916 = vsub.s32 0, %v915
    %v917 = vrot.slane %v880, %v916
    %v919 = vadd.f32 %v911, %v917
    %v920 = vadd.f32 %v912, %v917
    %v921 = vld [vmem:[#allocation11] sm:$0xff]
    %v922 = vld [vmem:[#allocation11 + $0x8] sm:$0xff]
    %v923 = vld [vmem:[#allocation11 + $0x10] sm:$0xff]
    %v924 = vld [vmem:[#allocation11 + $0x18] sm:$0xff]
    %v925 = vld [vmem:[#allocation11 + $0x20] sm:$0xff]
    %v926 = vld [vmem:[#allocation11 + $0x28] sm:$0xff]
    %v927 = vld [vmem:[#allocation11 + $0x30] sm:$0xff]
    %v928 = vld [vmem:[#allocation11 + $0x38] sm:$0xff]
    %v929 = vld [vmem:[#allocation11 + $0x40] sm:$0xff]
    %v930 = vld [vmem:[#allocation11 + $0x48] sm:$0xff]
    %v931 = vld [vmem:[#allocation11 + $0x50] sm:$0xff]
    %v932 = vld [vmem:[#allocation11 + $0x58] sm:$0xff]
    %v933 = vld [vmem:[#allocation11 + $0x60] sm:$0xff]
    %v934 = vld [vmem:[#allocation11 + $0x68] sm:$0xff]
    %v935 = vld [vmem:[#allocation11 + $0x70] sm:$0xff]
    %v936 = vld [vmem:[#allocation11 + $0x78] sm:$0xff]
    %v937 = vld [vmem:[#allocation11 + $0x80] sm:$0xff]
    %v938 = vld [vmem:[#allocation11 + $0x88] sm:$0xff]
    %v939 = vld [vmem:[#allocation11 + $0x90] sm:$0xff]
    %v940 = vld [vmem:[#allocation11 + $0x98] sm:$0xff]
    %v941 = vld [vmem:[#allocation11 + $0xa0] sm:$0xff]
    %v942 = vld [vmem:[#allocation11 + $0xa8] sm:$0xff]
    %v943 = vld [vmem:[#allocation11 + $0xb0] sm:$0xff]
    %v944 = vld [vmem:[#allocation11 + $0xb8] sm:$0xff]
    %v945 = vld [vmem:[#allocation11 + $0xc0] sm:$0xff]
    %v946 = vld [vmem:[#allocation11 + $0xc8] sm:$0xff]
    %v947 = vld [vmem:[#allocation11 + $0xd0] sm:$0xff]
    %v948 = vld [vmem:[#allocation11 + $0xd8] sm:$0xff]
    %v949 = vld [vmem:[#allocation11 + $0xe0] sm:$0xff]
    %v950 = vld [vmem:[#allocation11 + $0xe8] sm:$0xff]
    %v951 = vld [vmem:[#allocation11 + $0xf0] sm:$0xff]
    %v952 = vld [vmem:[#allocation11 + $0xf8] sm:$0xff]
    %v953 = vld [vmem:[%s11] sm:$0x3]
    %v955 = vlaneseq
    %v956 = vshrl.u32 %v955, 7
    %v957 = vsub.s32 0, %v956
    %v958 = vrot.slane %v953, %v957
    %v959 = vlaneseq
    %v960 = vshrl.u32 %v959, 7
    %v961 = vsub.s32 1, %v960
    %v962 = vrot.slane %v953, %v961
    %965 = vmatprep.subr.mxu0 %v922
    %966 = vmatpush1.msra.mxu0 %v921
    %967 = vmatprep.subr.mxu0 %v924
    %968 = vmatpush1.msra.mxu0 %v923
    %969 = vmatprep.subr.mxu0 %v926
    %970 = vmatpush1.msra.mxu0 %v925
    %971 = vmatprep.subr.mxu0 %v928
    %972 = vmatpush1.msra.mxu0 %v927
    %973 = vmatprep.subr.mxu0 %v930
    %974 = vmatpush1.msra.mxu0 %v929
    %975 = vmatprep.subr.mxu0 %v932
    %976 = vmatpush1.msra.mxu0 %v931
    %977 = vmatprep.subr.mxu0 %v934
    %978 = vmatpush1.msra.mxu0 %v933
    %979 = vmatprep.subr.mxu0 %v936
    %980 = vmatpush1.msra.mxu0 %v935
    %981 = vmatprep.subr.mxu0 %v938
    %982 = vmatpush1.msra.mxu0 %v937
    %983 = vmatprep.subr.mxu0 %v940
    %984 = vmatpush1.msra.mxu0 %v939
    %985 = vmatprep.subr.mxu0 %v942
    %986 = vmatpush1.msra.mxu0 %v941
    %987 = vmatprep.subr.mxu0 %v944
    %988 = vmatpush1.msra.mxu0 %v943
    %989 = vmatprep.subr.mxu0 %v946
    %990 = vmatpush1.msra.mxu0 %v945
    %991 = vmatprep.subr.mxu0 %v948
    %992 = vmatpush1.msra.mxu0 %v947
    %993 = vmatprep.subr.mxu0 %v950
    %994 = vmatpush1.msra.mxu0 %v949
    %995 = vmatprep.subr.mxu0 %v952
    %996 = vmatpush1.msra.mxu0 %v951
    %997 = vmatprep.subr.mxu0 0.0
    %998 = vmatpush1.msra.mxu0 0.0
    %999 = vmatprep.subr.mxu0 0.0
    %1000 = vmatpush1.msra.mxu0 0.0
    %1001 = vmatprep.subr.mxu0 0.0
    %1002 = vmatpush1.msra.mxu0 0.0
    %1003 = vmatprep.subr.mxu0 0.0
    %1004 = vmatpush1.msra.mxu0 0.0
    %1005 = vmatprep.subr.mxu0 0.0
    %1006 = vmatpush1.msra.mxu0 0.0
    %1007 = vmatprep.subr.mxu0 0.0
    %1008 = vmatpush1.msra.mxu0 0.0
    %1009 = vmatprep.subr.mxu0 0.0
    %1010 = vmatpush1.msra.mxu0 0.0
    %1011 = vmatprep.subr.mxu0 0.0
    %1012 = vmatpush1.msra.mxu0 0.0
    %1013 = vmatprep.subr.mxu0 0.0
    %1014 = vmatpush1.msra.mxu0 0.0
    %1015 = vmatprep.subr.mxu0 0.0
    %1016 = vmatpush1.msra.mxu0 0.0
    %1017 = vmatprep.subr.mxu0 0.0
    %1018 = vmatpush1.msra.mxu0 0.0
    %1019 = vmatprep.subr.mxu0 0.0
    %1020 = vmatpush1.msra.mxu0 0.0
    %1021 = vmatprep.subr.mxu0 0.0
    %1022 = vmatpush1.msra.mxu0 0.0
    %1023 = vmatprep.subr.mxu0 0.0
    %1024 = vmatpush1.msra.mxu0 0.0
    %1025 = vmatprep.subr.mxu0 0.0
    %1026 = vmatpush1.msra.mxu0 0.0
    %1027 = vmatprep.subr.mxu0 0.0
    %1028 = vmatpush1.msra.mxu0 0.0
    %1029 = vmatprep.mubr.f32.mxu0 0.0
    %1030 = vmatmul.mubr.f32.gmra.mrb[0].mxu0 %v919
    %v1031 = vpop.f32.mrb[0].mxu0
    %v1032 = vadd.f32 %v958, %v1031
    %v1033 = vpop.f32.mrb[0].mxu0
    %v1034 = vadd.f32 %v962, %v1033
    %1035 = vmatprep.mubr.f32.mxu0 0.0
    %1036 = vmatmul.mubr.f32.gmra.mrb[0].mxu0 %v920
    %v1037 = vpop.f32.mrb[0].mxu0
    %v1038 = vadd.f32 %v958, %v1037
    %v1039 = vpop.f32.mrb[0].mxu0
    %v1040 = vadd.f32 %v962, %v1039
    %1041 = vdwg.mxu0
    %v1042 = vmax.f32 %v1032, 0.0
    %v1043 = vmax.f32 %v1034, 0.0
    %v1044 = vmax.f32 %v1038, 0.0
    %v1045 = vmax.f32 %v1040, 0.0
    %v1046 = vld [vmem:[#allocation13] sm:$0xff]
    %v1047 = vld [vmem:[#allocation13 + $0x8] sm:$0xff]
    %v1048 = vld [vmem:[#allocation13 + $0x10] sm:$0xff]
    %v1049 = vld [vmem:[#allocation13 + $0x18] sm:$0xff]
    %v1050 = vld [vmem:[#allocation13 + $0x20] sm:$0xff]
    %v1051 = vld [vmem:[#allocation13 + $0x28] sm:$0xff]
    %v1052 = vld [vmem:[#allocation13 + $0x30] sm:$0xff]
    %v1053 = vld [vmem:[#allocation13 + $0x38] sm:$0xff]
    %v1054 = vld [vmem:[#allocation13 + $0x40] sm:$0xff]
    %v1055 = vld [vmem:[#allocation13 + $0x48] sm:$0xff]
    %v1056 = vld [vmem:[#allocation13 + $0x50] sm:$0xff]
    %v1057 = vld [vmem:[#allocation13 + $0x58] sm:$0xff]
    %v1058 = vld [vmem:[#allocation13 + $0x60] sm:$0xff]
    %v1059 = vld [vmem:[#allocation13 + $0x68] sm:$0xff]
    %v1060 = vld [vmem:[#allocation13 + $0x70] sm:$0xff]
    %v1061 = vld [vmem:[#allocation13 + $0x78] sm:$0xff]
    %v1062 = vld [vmem:[#allocation13 + $0x80] sm:$0xff]
    %v1063 = vld [vmem:[#allocation13 + $0x88] sm:$0xff]
    %v1064 = vld [vmem:[#allocation13 + $0x90] sm:$0xff]
    %v1065 = vld [vmem:[#allocation13 + $0x98] sm:$0xff]
    %v1066 = vld [vmem:[#allocation13 + $0xa0] sm:$0xff]
    %v1067 = vld [vmem:[#allocation13 + $0xa8] sm:$0xff]
    %v1068 = vld [vmem:[#allocation13 + $0xb0] sm:$0xff]
    %v1069 = vld [vmem:[#allocation13 + $0xb8] sm:$0xff]
    %v1070 = vld [vmem:[#allocation13 + $0xc0] sm:$0xff]
    %v1071 = vld [vmem:[#allocation13 + $0xc8] sm:$0xff]
    %v1072 = vld [vmem:[#allocation13 + $0xd0] sm:$0xff]
    %v1073 = vld [vmem:[#allocation13 + $0xd8] sm:$0xff]
    %v1074 = vld [vmem:[#allocation13 + $0xe0] sm:$0xff]
    %v1075 = vld [vmem:[#allocation13 + $0xe8] sm:$0xff]
    %v1076 = vld [vmem:[#allocation13 + $0xf0] sm:$0xff]
    %v1077 = vld [vmem:[#allocation13 + $0xf8] sm:$0xff]
    %v1078 = vld [vmem:[%s13] sm:$0x1]
    %v1080 = vlaneseq
    %v1081 = vshrl.u32 %v1080, 7
    %v1082 = vsub.s32 0, %v1081
    %v1083 = vrot.slane %v1078, %v1082
    %1085 = vmatprep.subr.mxu0 0.0
    %1086 = vmatpush1.msra.mxu0 %v1046
    %1087 = vmatprep.subr.mxu0 0.0
    %1088 = vmatpush1.msra.mxu0 %v1047
    %1089 = vmatprep.subr.mxu0 0.0
    %1090 = vmatpush1.msra.mxu0 %v1048
    %1091 = vmatprep.subr.mxu0 0.0
    %1092 = vmatpush1.msra.mxu0 %v1049
    %1093 = vmatprep.subr.mxu0 0.0
    %1094 = vmatpush1.msra.mxu0 %v1050
    %1095 = vmatprep.subr.mxu0 0.0
    %1096 = vmatpush1.msra.mxu0 %v1051
    %1097 = vmatprep.subr.mxu0 0.0
    %1098 = vmatpush1.msra.mxu0 %v1052
    %1099 = vmatprep.subr.mxu0 0.0
    %1100 = vmatpush1.msra.mxu0 %v1053
    %1101 = vmatprep.subr.mxu0 0.0
    %1102 = vmatpush1.msra.mxu0 %v1054
    %1103 = vmatprep.subr.mxu0 0.0
    %1104 = vmatpush1.msra.mxu0 %v1055
    %1105 = vmatprep.subr.mxu0 0.0
    %1106 = vmatpush1.msra.mxu0 %v1056
    %1107 = vmatprep.subr.mxu0 0.0
    %1108 = vmatpush1.msra.mxu0 %v1057
    %1109 = vmatprep.subr.mxu0 0.0
    %1110 = vmatpush1.msra.mxu0 %v1058
    %1111 = vmatprep.subr.mxu0 0.0
    %1112 = vmatpush1.msra.mxu0 %v1059
    %1113 = vmatprep.subr.mxu0 0.0
    %1114 = vmatpush1.msra.mxu0 %v1060
    %1115 = vmatprep.subr.mxu0 0.0
    %1116 = vmatpush1.msra.mxu0 %v1061
    %1117 = vmatprep.subr.mxu0 0.0
    %1118 = vmatpush1.msra.mxu0 %v1062
    %1119 = vmatprep.subr.mxu0 0.0
    %1120 = vmatpush1.msra.mxu0 %v1063
    %1121 = vmatprep.subr.mxu0 0.0
    %1122 = vmatpush1.msra.mxu0 %v1064
    %1123 = vmatprep.subr.mxu0 0.0
    %1124 = vmatpush1.msra.mxu0 %v1065
    %1125 = vmatprep.subr.mxu0 0.0
    %1126 = vmatpush1.msra.mxu0 %v1066
    %1127 = vmatprep.subr.mxu0 0.0
    %1128 = vmatpush1.msra.mxu0 %v1067
    %1129 = vmatprep.subr.mxu0 0.0
    %1130 = vmatpush1.msra.mxu0 %v1068
    %1131 = vmatprep.subr.mxu0 0.0
    %1132 = vmatpush1.msra.mxu0 %v1069
    %1133 = vmatprep.subr.mxu0 0.0
    %1134 = vmatpush1.msra.mxu0 %v1070
    %1135 = vmatprep.subr.mxu0 0.0
    %1136 = vmatpush1.msra.mxu0 %v1071
    %1137 = vmatprep.subr.mxu0 0.0
    %1138 = vmatpush1.msra.mxu0 %v1072
    %1139 = vmatprep.subr.mxu0 0.0
    %1140 = vmatpush1.msra.mxu0 %v1073
    %1141 = vmatprep.subr.mxu0 0.0
    %1142 = vmatpush1.msra.mxu0 %v1074
    %1143 = vmatprep.subr.mxu0 0.0
    %1144 = vmatpush1.msra.mxu0 %v1075
    %1145 = vmatprep.subr.mxu0 0.0
    %1146 = vmatpush1.msra.mxu0 %v1076
    %1147 = vmatprep.subr.mxu0 0.0
    %1148 = vmatpush1.msra.mxu0 %v1077
    %1149 = vmatprep.mubr.f32.mxu0 %v1043
    %1150 = vmatmul.mubr.f32.gmra.mrb[0].mxu0 %v1042
    %v1151 = vpop.f32.mrb[0].mxu0
    %v1152 = vadd.f32 %v1083, %v1151
    %v1153 = vpop.f32.mrb[0].mxu0
    %1154 = vmatprep.mubr.f32.mxu0 %v1045
    %1155 = vmatmul.mubr.f32.gmra.mrb[0].mxu0 %v1044
    %v1156 = vpop.f32.mrb[0].mxu0
    %v1157 = vadd.f32 %v1083, %v1156
    %v1158 = vpop.f32.mrb[0].mxu0
    %1159 = vdwg.mxu0
    %v1160 = vadd.f32 %v919, %v1152
    %v1161 = vadd.f32 %v920, %v1157
    %v1162 = vld [vmem:[%s14] sm:$0x1]
    %v1163 = vld [vmem:[%s15] sm:$0x1]
    %1164 = vadd.xlane.f32.xlu0 %v1160
    %v1165 = vpop.xlane.xlu0 %1164
    %1166 = vadd.xlane.f32.xlu0 %v1161
    %v1167 = vpop.xlane.xlu0 %1166
    %v1168 = vmul.f32 %v1165, 0.01
    %v1169 = vmul.f32 %v1167, 0.01
    %v1170 = vsub.f32 %v1160, %v1168
    %v1171 = vsub.f32 %v1161, %v1169
    %v1172 = vmul.f32 %v1170, %v151
    %v1173 = vmul.f32 %v1171, %v151
    %v1174 = vmul.f32 %v1172, %v1172
    %v1175 = vmul.f32 %v1173, %v1173
    %1176 = vadd.xlane.f32.xlu0 %v1174
    %v1177 = vpop.xlane.xlu0 %1176
    %1178 = vadd.xlane.f32.xlu0 %v1175
    %v1179 = vpop.xlane.xlu0 %1178
    %v1180 = vmul.f32 %v1177, 0.01
    %v1181 = vmul.f32 %v1179, 0.01
    %v1182 = vadd.f32 %v1180, 1e-05
    %v1183 = vadd.f32 %v1181, 1e-05
    %v1184 = vrsqrt.pop %v1182
    %v1185 = vrsqrt.pop %v1183
    %v1186 = vmul.f32 %v1172, %v1184
    %v1187 = vmul.f32 %v1173, %v1185
    %v1189 = vlaneseq
    %v1190 = vshrl.u32 %v1189, 7
    %v1191 = vsub.s32 0, %v1190
    %v1192 = vrot.slane %v1162, %v1191
    %v1194 = vmul.f32 %v1186, %v1192
    %v1195 = vmul.f32 %v1187, %v1192
    %v1197 = vlaneseq
    %v1198 = vshrl.u32 %v1197, 7
    %v1199 = vsub.s32 0, %v1198
    %v1200 = vrot.slane %v1163, %v1199
    %v1202 = vadd.f32 %v1194, %v1200
    %v1203 = vadd.f32 %v1195, %v1200
    %v1204 = vrot.slane %v1202, 4
    %v1205 = vadd.f32 %v1202, %v1204
    %v1206 = vrot.slane %v1205, 2
    %v1207 = vadd.f32 %v1205, %v1206
    %v1208 = vrot.slane %v1207, 1
    %v1209 = vadd.f32 %v1207, %v1208
    %v1210 = vrot.slane %v1203, 4
    %v1211 = vadd.f32 %v1203, %v1210
    %v1212 = vrot.slane %v1211, 2
    %v1213 = vadd.f32 %v1211, %v1212
    %v1214 = vrot.slane %v1213, 1
    %v1215 = vadd.f32 %v1213, %v1214
    %v1216 = vmul.f32 %v1209, 0.125
    %v1217 = vmul.f32 %v1215, 0.125
    %vm1220 = vcmask 1041409
    %v1221 = vsel %vm1220, %v1217, %v1216
    %1223 = vst [vmem:[#allocation14] sm:$0x3] %v1221
    // Predicated region
    $region94: #{tpu_custom_call.1} parent=1 // pred_check
      _
    $region95: #{tpu_custom_call.1} parent=1 // pred_check_branch
      %1225 = sbr.rel (0) target = $region97
    $region96: #{tpu_custom_call.1} parent=1 // pred_region
      %s1227 = ssub.s32 32, 32
      %1228 = vsyncadd [#allocation4], %s1227
      %s1230 = sshll.u32 [#allocation14], 4
      %s1231 = int_to_ptr.vmem [resolvable:$true] %s1230
      %1233 = dma.vmem_to_hbm [thread:$0]  %s1231, 32, %s16, [#allocation4]
    $region97: #{tpu_custom_call.1} parent=1 // pred_fallthru
      _
    // Predicated region
    $region98: #{tpu_custom_call.1} parent=1 // pred_check
      _
    $region99: #{tpu_custom_call.1} parent=1 // pred_check_branch
      %1235 = sbr.rel (0) target = $region101
    $region100: #{tpu_custom_call.1} parent=1 // pred_region
      %1236 = dma.done [#allocation4], 32
    $region101: #{tpu_custom_call.1} parent=1 // pred_fallthru
      _
    %1237 = vsyncpa [#allocation3], 1
    %1238 = vsyncpa [#allocation6], 1
    %1239 = vsyncpa [#allocation9], 1
    %1240 = vsyncpa [#allocation12], 1
    %1241 = vsyncpa [#allocation4], 1

</llo_original>
